<compile_context>
chip_gen: v5e
topology: v5e:2x2
jax: 0.10.0
libtpu: 0.0.40
codegen_flags: <defaults>
</compile_context>

<pallas_src>
import functools

import jax
import jax.numpy as jnp
from jax.experimental import pallas as pl
from jax.experimental.pallas import tpu as pltpu  # noqa: F401  (grid-less call; kept for completeness)

# ----------------------------- config ---------------------------------------
DIM_MODEL = 32
N_HEADS = 4
DIM_FEEDFORWARD = 64
SEQ_DEC = 8
SEQ_ENC = 8        # spec applies the (DS,DS) causal mask to cross-attn -> ES == DS
BATCH = 2
LN_EPS = 1e-5
NEG_INF = -1e30    # finite "minus infinity": safe because the causal mask always
                   # leaves >=1 unmasked entry per row (ES == DS is asserted).

# Row indices of the packed bias / LayerNorm block (misc slab, lanes [D, 2D)).
(_BV_S, _BO_S, _BV_C, _BO_C, _B2,
 _LN1G, _LN1B, _LN2G, _LN2B, _LN3G, _LN3B) = range(11)
_N_BROWS = 11


def _round_up(x, m):
    return (x + m - 1) // m * m


# --------------------------- kernel helpers ----------------------------------
def _layer_norm(x, gamma, beta, eps=LN_EPS):
    mu = jnp.mean(x, axis=-1, keepdims=True)
    var = jnp.mean((x - mu) ** 2, axis=-1, keepdims=True)
    return (x - mu) * jax.lax.rsqrt(var + eps) * gamma + beta


def _attention(q, k, v, mask3, wo_t, bo, *, batch, n_heads):
    """softmax(q k^T + mask) v followed by a single output projection.

    q is pre-scaled by 1/sqrt(dh) (folded into the weights wrapper-side).
    q, k, v : (batch*S, D).  mask3 : (1, Sq, Sk) additive.  wo_t : (D, D) (in, out).
    """
    n, d = q.shape
    s_q = n // batch
    s_k = k.shape[0] // batch
    dh = d // n_heads

    q3 = q.reshape(batch, s_q, d)
    k3 = k.reshape(batch, s_k, d)
    v3 = v.reshape(batch, s_k, d)

    heads = []
    for h in range(n_heads):                     # static unroll; each iter batched over B
        sl = slice(h * dh, (h + 1) * dh)
        sc = jnp.einsum("bqd,bkd->bqk", q3[:, :, sl], k3[:, :, sl],
                        preferred_element_type=jnp.float32)            # (B,Sq,Sk)
        sc = sc + mask3
        sc = sc - jnp.max(sc, axis=-1, keepdims=True)
        p = jnp.exp(sc)
        p = p * pl.reciprocal(jnp.sum(p, axis=-1, keepdims=True), approx=False)
        heads.append(jnp.einsum("bqk,bkd->bqd", p, v3[:, :, sl],
                                preferred_element_type=jnp.float32))    # (B,Sq,dh)
    # lane-concat of the 4 (dh-wide) heads -> ONE (N,D)@(D,D) output projection
    concat = jnp.concatenate(heads, axis=-1).reshape(n, d)
    return jnp.dot(concat, wo_t, preferred_element_type=jnp.float32) + bo


def _decoder_layer_kernel(act_ref, w_ref, misc_ref, out_ref, *,
                          n_heads, pre_norm, batch, d, f):
    n = out_ref.shape[0]
    s = n // batch                               # decoder sequence length

    # --- activation slab lane layout: [x | enc | pq_s | pk_s | pq_c | pk_c | pad]
    x    = act_ref[:, 0 * d:1 * d]
    enc  = act_ref[:, 1 * d:2 * d]
    pq_s = act_ref[:, 2 * d:3 * d]               # (posd@Wq_s + bq_s) * scale
    pk_s = act_ref[:, 3 * d:4 * d]               #  posd@Wk_s + bk_s
    pq_c = act_ref[:, 4 * d:5 * d]               # (posd@Wq_c + bq_c) * scale
    pk_c = act_ref[:, 5 * d:6 * d]               #  pose@Wk_c + bk_c

    def brow(i):                                 # (1, d) bias / LayerNorm row
        return misc_ref[i:i + 1, d:2 * d]

    ln1g, ln1b = brow(_LN1G), brow(_LN1B)
    ln2g, ln2b = brow(_LN2G), brow(_LN2B)
    ln3g, ln3b = brow(_LN3G), brow(_LN3B)

    # Causal additive mask; the reference forward uses it for BOTH attentions.
    row = jax.lax.broadcasted_iota(jnp.int32, (s, s), 0)
    col = jax.lax.broadcasted_iota(jnp.int32, (s, s), 1)
    mask3 = jnp.where(col <= row, 0.0, NEG_INF)[None, :, :]             # (1,S,S)

    # ---------------- self-attention -----------------------------------------
    skip = x
    xn = _layer_norm(x, ln1g, ln1b) if pre_norm else x
    qkv = jnp.dot(xn, w_ref[:, 0:3 * d], preferred_element_type=jnp.float32)  # (N,3D)
    q = qkv[:, 0:d] + pq_s                       # scale & bq already folded in
    k = qkv[:, d:2 * d] + pk_s
    v = qkv[:, 2 * d:3 * d] + brow(_BV_S)
    attn = _attention(q, k, v, mask3, w_ref[:, 3 * d:4 * d], brow(_BO_S),
                      batch=batch, n_heads=n_heads)
    x = skip + attn                              # dropout1 == identity (eval)

    # ---------------- cross-attention -----------------------------------------
    if pre_norm:
        skip = x
        xc = _layer_norm(x, ln2g, ln2b)
    else:
        x = _layer_norm(x, ln1g, ln1b)
        skip = x
        xc = x
    qc = jnp.dot(xc, w_ref[:, 6 * d + f:7 * d + f],
                 preferred_element_type=jnp.float32) + pq_c
    kv = jnp.dot(enc, w_ref[:, 4 * d:6 * d], preferred_element_type=jnp.float32)  # (N,2D)
    kc = kv[:, 0:d] + pk_c
    vc = kv[:, d:2 * d] + brow(_BV_C)
    attn = _attention(qc, kc, vc, mask3, w_ref[:, 7 * d + f:8 * d + f],
                      brow(_BO_C), batch=batch, n_heads=n_heads)
    x = skip + attn                              # dropout2 == identity

    # ---------------- feed-forward ---------------------------------------------
    if pre_norm:
        skip = x
        xf = _layer_norm(x, ln3g, ln3b)
    else:
        x = _layer_norm(x, ln2g, ln2b)
        skip = x
        xf = x
    h1 = jnp.dot(xf, w_ref[:, 6 * d:6 * d + f],
                 preferred_element_type=jnp.float32) + misc_ref[0:1, 2 * d:2 * d + f]
    h1 = jnp.maximum(h1, 0.0)                    # ReLU; inner dropout == identity
    h2 = jnp.dot(h1, misc_ref[0:f, 0:d], preferred_element_type=jnp.float32) + brow(_B2)
    x = skip + h2                                # dropout3 == identity
    if not pre_norm:
        x = _layer_norm(x, ln3g, ln3b)

    out_ref[...] = x.astype(out_ref.dtype)


# ------------------------------ wrapper ---------------------------------------
@functools.partial(jax.jit, static_argnames=("n_heads", "pre_norm"))
def act_decoder_layer(x, encoder_out, decoder_pos_embed, encoder_pos_embed,
                      params, *, n_heads=N_HEADS, pre_norm=True):
    b, s, d = x.shape
    _, se, _ = encoder_out.shape
    f = params["w1"].shape[0]
    # The reference forward applies the (DS,DS) causal mask to cross-attention too,
    # which is only well-formed when ES == DS.
    assert se == s, "spec applies the (DS,DS) causal mask to cross-attention -> ES must equal DS"

    f32 = jnp.float32
    dh = d // n_heads
    scale = 1.0 / float(dh) ** 0.5

    if decoder_pos_embed is None:
        decoder_pos_embed = jnp.zeros((1, s, d), f32)
    if encoder_pos_embed is None:
        encoder_pos_embed = jnp.zeros((1, se, d), f32)

    x2 = x.reshape(b * s, d).astype(f32)
    enc2 = encoder_out.reshape(b * se, d).astype(f32)
    posd2 = jnp.broadcast_to(decoder_pos_embed.astype(f32), (b, s, d)).reshape(b * s, d)
    pose2 = jnp.broadcast_to(encoder_pos_embed.astype(f32), (b, se, d)).reshape(b * se, d)

    # Pre-transposed (in, out) weights; 1/sqrt(dh) folded into the Q paths.
    wq_s = params["self_wq"].T.astype(f32) * scale
    wk_s = params["self_wk"].T.astype(f32)
    wv_s = params["self_wv"].T.astype(f32)
    wo_s = params["self_wo"].T.astype(f32)
    wq_c = params["cross_wq"].T.astype(f32) * scale
    wk_c = params["cross_wk"].T.astype(f32)
    wv_c = params["cross_wv"].T.astype(f32)
    wo_c = params["cross_wo"].T.astype(f32)
    w1t = params["w1"].T.astype(f32)                                          # (D, F)
    w2t = params["w2"].T.astype(f32)                                          # (F, D)

    # Position-embedding projections precomputed here (tiny matmuls that overlap
    # the kernel's input DMAs); Q/K biases + softmax scale folded in.
    pq_s = posd2 @ wq_s + params["self_bq"].astype(f32) * scale
    pk_s = posd2 @ wk_s + params["self_bk"].astype(f32)
    pq_c = posd2 @ wq_c + params["cross_bq"].astype(f32) * scale
    pk_c = pose2 @ wk_c + params["cross_bk"].astype(f32)

    # ---- activation slab: ONE lane-dense (B*S, 256) array -> a single dense DMA.
    act_lanes = _round_up(6 * d, 128)
    act = jnp.concatenate(
        [x2, enc2, pq_s, pk_s, pq_c, pk_c,
         jnp.zeros((b * s, act_lanes - 6 * d), f32)], axis=1)

    # ---- weight slab: all (D, .) weights lane-packed so no block crosses a
    #      128-lane tile boundary: [Wqkv_s(3D) | Wo_s(D) | Wkv_c(2D) | W1(F) | Wq_c(D) | Wo_c(D)]
    wslab = jnp.concatenate(
        [wq_s, wk_s, wv_s, wo_s, wk_c, wv_c, w1t, wq_c, wo_c], axis=1)        # (D, 8D+F)
    w_lanes = _round_up(wslab.shape[1], 128)
    if w_lanes != wslab.shape[1]:
        wslab = jnp.concatenate(
            [wslab, jnp.zeros((d, w_lanes - wslab.shape[1]), f32)], axis=1)

    # ---- misc slab: W2^T (lanes 0:D), 11 bias/LayerNorm rows (lanes D:2D),
    #      b1 (row 0, lanes 2D:2D+F).
    bvec = jnp.stack([
        params["self_bv"], params["self_bo"],
        params["cross_bv"], params["cross_bo"],
        params["b2"],
        params["ln1_g"], params["ln1_b"],
        params["ln2_g"], params["ln2_b"],
        params["ln3_g"], params["ln3_b"],
    ], axis=0).astype(f32)                                                    # (11, D)
    misc_rows = _round_up(max(f, _N_BROWS), 8)
    misc_lanes = _round_up(2 * d + f, 128)
    misc = jnp.zeros((misc_rows, misc_lanes), f32)
    misc = misc.at[0:f, 0:d].set(w2t)
    misc = misc.at[0:_N_BROWS, d:2 * d].set(bvec)
    misc = misc.at[0, 2 * d:2 * d + f].set(params["b1"].astype(f32))

    kernel = functools.partial(_decoder_layer_kernel, n_heads=n_heads,
                               pre_norm=pre_norm, batch=b, d=d, f=f)
    out2 = pl.pallas_call(                       # grid-less: one launch, 3 dense input DMAs
        kernel,
        out_shape=jax.ShapeDtypeStruct((b * s, d), x.dtype),
    )(act, wslab, misc)
    return out2.reshape(b, s, d)


# ------------------------- pure-JAX reference ----------------------------------
def _ref_mha(q_in, k_in, v_in, p, prefix, mask, n_heads):
    b, sq, d = q_in.shape
    sk = k_in.shape[1]
    dh = d // n_heads
    q = q_in @ p[f"{prefix}_wq"].T + p[f"{prefix}_bq"]
    k = k_in @ p[f"{prefix}_wk"].T + p[f"{prefix}_bk"]
    v = v_in @ p[f"{prefix}_wv"].T + p[f"{prefix}_bv"]
    q = q.reshape(b, sq, n_heads, dh).transpose(0, 2, 1, 3) * (dh ** -0.5)
    k = k.reshape(b, sk, n_heads, dh).transpose(0, 2, 1, 3)
    v = v.reshape(b, sk, n_heads, dh).transpose(0, 2, 1, 3)
    sc = jnp.einsum("bhqd,bhkd->bhqk", q, k) + mask
    a = jax.nn.softmax(sc, axis=-1)
    o = jnp.einsum("bhqk,bhkd->bhqd", a, v).transpose(0, 2, 1, 3).reshape(b, sq, d)
    return o @ p[f"{prefix}_wo"].T + p[f"{prefix}_bo"]


def ref_decoder_layer(x, enc, pos_d, pos_e, p, *, n_heads=N_HEADS, pre_norm=True):
    _, s, _ = x.shape
    mask = jnp.where(jnp.arange(s)[None, :] <= jnp.arange(s)[:, None], 0.0, -jnp.inf)

    def ln(t, g, bb):
        mu = t.mean(-1, keepdims=True)
        var = ((t - mu) ** 2).mean(-1, keepdims=True)
        return (t - mu) * jax.lax.rsqrt(var + LN_EPS) * g + bb

    skip = x
    xn = ln(x, p["ln1_g"], p["ln1_b"]) if pre_norm else x
    qk = xn + pos_d
    x = skip + _ref_mha(qk, qk, xn, p, "self", mask, n_heads)
    if pre_norm:
        skip = x
        xc = ln(x, p["ln2_g"], p["ln2_b"])
    else:
        x = ln(x, p["ln1_g"], p["ln1_b"])
        skip = x
        xc = x
    x = skip + _ref_mha(xc + pos_d, enc + pos_e, enc, p, "cross", mask, n_heads)
    if pre_norm:
        skip = x
        xf = ln(x, p["ln3_g"], p["ln3_b"])
    else:
        x = ln(x, p["ln2_g"], p["ln2_b"])
        skip = x
        xf = x
    h = jnp.maximum(xf @ p["w1"].T + p["b1"], 0.0)
    x = skip + (h @ p["w2"].T + p["b2"])
    if not pre_norm:
        x = ln(x, p["ln3_g"], p["ln3_b"])
    return x


# ------------------------------- params ----------------------------------------
def init_params(key, d=DIM_MODEL, f=DIM_FEEDFORWARD):
    ks = jax.random.split(key, 24)
    n = lambda k, shape, sc=0.05: sc * jax.random.normal(k, shape, jnp.float32)
    return {
        "self_wq": n(ks[0], (d, d)), "self_bq": n(ks[1], (d,), 0.02),
        "self_wk": n(ks[2], (d, d)), "self_bk": n(ks[3], (d,), 0.02),
        "self_wv": n(ks[4], (d, d)), "self_bv": n(ks[5], (d,), 0.02),
        "self_wo": n(ks[6], (d, d)), "self_bo": n(ks[7], (d,), 0.02),
        "cross_wq": n(ks[8], (d, d)), "cross_bq": n(ks[9], (d,), 0.02),
        "cross_wk": n(ks[10], (d, d)), "cross_bk": n(ks[11], (d,), 0.02),
        "cross_wv": n(ks[12], (d, d)), "cross_bv": n(ks[13], (d,), 0.02),
        "cross_wo": n(ks[14], (d, d)), "cross_bo": n(ks[15], (d,), 0.02),
        "w1": n(ks[16], (f, d)), "b1": n(ks[17], (f,), 0.02),
        "w2": n(ks[18], (d, f)), "b2": n(ks[19], (d,), 0.02),
        "ln1_g": 1.0 + n(ks[20], (d,), 0.05), "ln1_b": n(ks[21], (d,), 0.02),
        "ln2_g": 1.0 + n(ks[22], (d,), 0.05), "ln2_b": n(ks[23], (d,), 0.02),
        "ln3_g": jnp.ones((d,), jnp.float32), "ln3_b": jnp.zeros((d,), jnp.float32),
    }


# --------------------------------- main -----------------------------------------
if __name__ == "__main__":
    key = jax.random.PRNGKey(0)
    kp, kx, ke, kd, kc = jax.random.split(key, 5)
    params = init_params(kp)
    x = jax.random.normal(kx, (BATCH, SEQ_DEC, DIM_MODEL), jnp.float32)
    enc = jax.random.normal(ke, (BATCH, SEQ_ENC, DIM_MODEL), jnp.float32)
    pos_d = 0.1 * jax.random.normal(kd, (1, SEQ_DEC, DIM_MODEL), jnp.float32)
    pos_e = 0.1 * jax.random.normal(kc, (1, SEQ_ENC, DIM_MODEL), jnp.float32)

    for pre_norm in (True, False):
        out = act_decoder_layer(x, enc, pos_d, pos_e, params, pre_norm=pre_norm)
        out = jax.block_until_ready(out)
        ref = ref_decoder_layer(x, enc, pos_d, pos_e, params, pre_norm=pre_norm)
        assert out.shape == (BATCH, SEQ_DEC, DIM_MODEL)
        assert jnp.allclose(out, ref, atol=2e-3, rtol=2e-3), \
            f"mismatch vs JAX reference (pre_norm={pre_norm})"

    print("KERNEL_OK")
</pallas_src>

<mosaic_0001>
module attributes {stable_mosaic.version = 11 : i64} {
  func.func @_decoder_layer_kernel(%arg0: memref<16x256xf32, #tpu.memory_space<vmem>>, %arg1: memref<32x384xf32, #tpu.memory_space<vmem>>, %arg2: memref<64x128xf32, #tpu.memory_space<vmem>>, %arg3: memref<16x32xf32, #tpu.memory_space<vmem>>) attributes {dimension_semantics = [], scalar_prefetch = 0 : i64, scratch_operands = 0 : i64, tpu.core_type = #tpu.core_type<tc>} {
    %c0 = arith.constant 0 : index
    %c0_0 = arith.constant 0 : index
    %0 = vector.load %arg0[%c0, %c0_0] : memref<16x256xf32, #tpu.memory_space<vmem>>, vector<16x32xf32>
    %c0_1 = arith.constant 0 : index
    %c32 = arith.constant 32 : index
    %1 = vector.load %arg0[%c0_1, %c32] : memref<16x256xf32, #tpu.memory_space<vmem>>, vector<16x32xf32>
    %c0_2 = arith.constant 0 : index
    %c64 = arith.constant 64 : index
    %2 = vector.load %arg0[%c0_2, %c64] : memref<16x256xf32, #tpu.memory_space<vmem>>, vector<16x32xf32>
    %c0_3 = arith.constant 0 : index
    %c96 = arith.constant 96 : index
    %3 = vector.load %arg0[%c0_3, %c96] : memref<16x256xf32, #tpu.memory_space<vmem>>, vector<16x32xf32>
    %c0_4 = arith.constant 0 : index
    %c128 = arith.constant 128 : index
    %4 = vector.load %arg0[%c0_4, %c128] : memref<16x256xf32, #tpu.memory_space<vmem>>, vector<16x32xf32>
    %c0_5 = arith.constant 0 : index
    %c160 = arith.constant 160 : index
    %5 = vector.load %arg0[%c0_5, %c160] : memref<16x256xf32, #tpu.memory_space<vmem>>, vector<16x32xf32>
    %c5 = arith.constant 5 : index
    %c32_6 = arith.constant 32 : index
    %6 = vector.load %arg2[%c5, %c32_6] : memref<64x128xf32, #tpu.memory_space<vmem>>, vector<1x32xf32>
    %c6 = arith.constant 6 : index
    %c32_7 = arith.constant 32 : index
    %7 = vector.load %arg2[%c6, %c32_7] : memref<64x128xf32, #tpu.memory_space<vmem>>, vector<1x32xf32>
    %c7 = arith.constant 7 : index
    %c32_8 = arith.constant 32 : index
    %8 = vector.load %arg2[%c7, %c32_8] : memref<64x128xf32, #tpu.memory_space<vmem>>, vector<1x32xf32>
    %c8 = arith.constant 8 : index
    %c32_9 = arith.constant 32 : index
    %9 = vector.load %arg2[%c8, %c32_9] : memref<64x128xf32, #tpu.memory_space<vmem>>, vector<1x32xf32>
    %c9 = arith.constant 9 : index
    %c32_10 = arith.constant 32 : index
    %10 = vector.load %arg2[%c9, %c32_10] : memref<64x128xf32, #tpu.memory_space<vmem>>, vector<1x32xf32>
    %c10 = arith.constant 10 : index
    %c32_11 = arith.constant 32 : index
    %11 = vector.load %arg2[%c10, %c32_11] : memref<64x128xf32, #tpu.memory_space<vmem>>, vector<1x32xf32>
    %12 = tpu.iota {dimensions = array<i32: 0>} : vector<8x8xi32>
    %13 = tpu.iota {dimensions = array<i32: 1>} : vector<8x8xi32>
    %14 = arith.cmpi sle, %13, %12 : vector<8x8xi32>
    %cst = arith.constant 0.000000e+00 : f32
    %cst_12 = arith.constant -1.000000e+30 : f32
    %15 = vector.broadcast %cst : f32 to vector<8x8xf32>
    %16 = vector.broadcast %cst_12 : f32 to vector<8x8xf32>
    %17 = arith.select %14, %15, %16 : vector<8x8xi1>, vector<8x8xf32>
    %18 = vector.shape_cast %17 : vector<8x8xf32> to vector<1x8x8xf32>
    %cst_13 = arith.constant dense<0.000000e+00> : vector<16xf32>
    %19 = vector.multi_reduction <add>, %0, %cst_13 [1] : vector<16x32xf32> to vector<16xf32>
    %20 = vector.shape_cast %19 : vector<16xf32> to vector<16x1xf32>
    %cst_14 = arith.constant 3.200000e+01 : f32
    %21 = vector.broadcast %cst_14 : f32 to vector<16x1xf32>
    %22 = arith.divf %20, %21 : vector<16x1xf32>
    %23 = vector.broadcast %22 : vector<16x1xf32> to vector<16x32xf32>
    %24 = arith.subf %0, %23 : vector<16x32xf32>
    %25 = arith.mulf %24, %24 : vector<16x32xf32>
    %cst_15 = arith.constant dense<0.000000e+00> : vector<16xf32>
    %26 = vector.multi_reduction <add>, %25, %cst_15 [1] : vector<16x32xf32> to vector<16xf32>
    %27 = vector.shape_cast %26 : vector<16xf32> to vector<16x1xf32>
    %cst_16 = arith.constant 3.200000e+01 : f32
    %28 = vector.broadcast %cst_16 : f32 to vector<16x1xf32>
    %29 = arith.divf %27, %28 : vector<16x1xf32>
    %30 = vector.broadcast %22 : vector<16x1xf32> to vector<16x32xf32>
    %31 = arith.subf %0, %30 : vector<16x32xf32>
    %cst_17 = arith.constant 9.99999974E-6 : f32
    %32 = vector.broadcast %cst_17 : f32 to vector<16x1xf32>
    %33 = arith.addf %29, %32 : vector<16x1xf32>
    %34 = math.rsqrt %33 : vector<16x1xf32>
    %35 = vector.broadcast %34 : vector<16x1xf32> to vector<16x32xf32>
    %36 = arith.mulf %31, %35 : vector<16x32xf32>
    %37 = vector.broadcast %6 : vector<1x32xf32> to vector<16x32xf32>
    %38 = arith.mulf %36, %37 : vector<16x32xf32>
    %39 = vector.broadcast %7 : vector<1x32xf32> to vector<16x32xf32>
    %40 = arith.addf %38, %39 : vector<16x32xf32>
    %c0_18 = arith.constant 0 : index
    %c0_19 = arith.constant 0 : index
    %41 = vector.load %arg1[%c0_18, %c0_19] : memref<32x384xf32, #tpu.memory_space<vmem>>, vector<32x96xf32>
    %cst_20 = arith.constant dense<0.000000e+00> : vector<16x96xf32>
    %42 = tpu.matmul %40, %41, %cst_20 {dimension_numbers = #tpu.dot_dimension_numbers<[1], [0], [0], [1], [0, 0, 1, 1], [], []>} : vector<16x32xf32>, vector<32x96xf32>, vector<16x96xf32> -> vector<16x96xf32>
    %43 = vector.extract_strided_slice %42 {offsets = [0, 0], sizes = [16, 32], strides = [1, 1]} : vector<16x96xf32> to vector<16x32xf32>
    %44 = arith.addf %43, %2 : vector<16x32xf32>
    %45 = vector.extract_strided_slice %42 {offsets = [0, 32], sizes = [16, 32], strides = [1, 1]} : vector<16x96xf32> to vector<16x32xf32>
    %46 = arith.addf %45, %3 : vector<16x32xf32>
    %47 = vector.extract_strided_slice %42 {offsets = [0, 64], sizes = [16, 32], strides = [1, 1]} : vector<16x96xf32> to vector<16x32xf32>
    %c0_21 = arith.constant 0 : index
    %c32_22 = arith.constant 32 : index
    %48 = vector.load %arg2[%c0_21, %c32_22] : memref<64x128xf32, #tpu.memory_space<vmem>>, vector<1x32xf32>
    %49 = vector.broadcast %48 : vector<1x32xf32> to vector<16x32xf32>
    %50 = arith.addf %47, %49 : vector<16x32xf32>
    %c0_23 = arith.constant 0 : index
    %c96_24 = arith.constant 96 : index
    %51 = vector.load %arg1[%c0_23, %c96_24] : memref<32x384xf32, #tpu.memory_space<vmem>>, vector<32x32xf32>
    %c1 = arith.constant 1 : index
    %c32_25 = arith.constant 32 : index
    %52 = vector.load %arg2[%c1, %c32_25] : memref<64x128xf32, #tpu.memory_space<vmem>>, vector<1x32xf32>
    %53 = vector.shape_cast %44 : vector<16x32xf32> to vector<2x8x32xf32>
    %54 = vector.shape_cast %46 : vector<16x32xf32> to vector<2x8x32xf32>
    %55 = vector.shape_cast %50 : vector<16x32xf32> to vector<2x8x32xf32>
    %56 = vector.extract_strided_slice %53 {offsets = [0, 0, 0], sizes = [2, 8, 8], strides = [1, 1, 1]} : vector<2x8x32xf32> to vector<2x8x8xf32>
    %57 = vector.extract_strided_slice %54 {offsets = [0, 0, 0], sizes = [2, 8, 8], strides = [1, 1, 1]} : vector<2x8x32xf32> to vector<2x8x8xf32>
    "tpu.trace_start"() <{level = 10 : i32, message = "bqd,bkd->bqk"}> : () -> ()
    %cst_26 = arith.constant dense<0.000000e+00> : vector<2x8x8xf32>
    %58 = tpu.matmul %56, %57, %cst_26 {dimension_numbers = #tpu.dot_dimension_numbers<[2], [2], [1], [1], [0, 0, 0, 1, 1, 1], [0], [0]>} : vector<2x8x8xf32>, vector<2x8x8xf32>, vector<2x8x8xf32> -> vector<2x8x8xf32>
    "tpu.trace_stop"() : () -> ()
    %59 = vector.broadcast %18 : vector<1x8x8xf32> to vector<2x8x8xf32>
    %60 = arith.addf %58, %59 : vector<2x8x8xf32>
    %cst_27 = arith.constant dense<0xFF800000> : vector<2x8xf32>
    %61 = vector.multi_reduction <maximumf>, %60, %cst_27 [2] : vector<2x8x8xf32> to vector<2x8xf32>
    %62 = vector.shape_cast %61 : vector<2x8xf32> to vector<2x8x1xf32>
    %63 = vector.broadcast %62 : vector<2x8x1xf32> to vector<2x8x8xf32>
    %64 = arith.subf %60, %63 : vector<2x8x8xf32>
    %65 = math.exp %64 : vector<2x8x8xf32>
    %cst_28 = arith.constant dense<0.000000e+00> : vector<2x8xf32>
    %66 = vector.multi_reduction <add>, %65, %cst_28 [2] : vector<2x8x8xf32> to vector<2x8xf32>
    %67 = vector.shape_cast %66 : vector<2x8xf32> to vector<2x8x1xf32>
    %68 = tpu.reciprocal %67 : vector<2x8x1xf32> -> vector<2x8x1xf32>
    %69 = vector.broadcast %68 : vector<2x8x1xf32> to vector<2x8x8xf32>
    %70 = arith.mulf %65, %69 : vector<2x8x8xf32>
    %71 = vector.extract_strided_slice %55 {offsets = [0, 0, 0], sizes = [2, 8, 8], strides = [1, 1, 1]} : vector<2x8x32xf32> to vector<2x8x8xf32>
    "tpu.trace_start"() <{level = 10 : i32, message = "bqk,bkd->bqd"}> : () -> ()
    %cst_29 = arith.constant dense<0.000000e+00> : vector<2x8x8xf32>
    %72 = tpu.matmul %70, %71, %cst_29 {dimension_numbers = #tpu.dot_dimension_numbers<[2], [1], [1], [2], [0, 0, 0, 1, 1, 2], [0], [0]>} : vector<2x8x8xf32>, vector<2x8x8xf32>, vector<2x8x8xf32> -> vector<2x8x8xf32>
    "tpu.trace_stop"() : () -> ()
    %73 = vector.extract_strided_slice %53 {offsets = [0, 0, 8], sizes = [2, 8, 8], strides = [1, 1, 1]} : vector<2x8x32xf32> to vector<2x8x8xf32>
    %74 = vector.extract_strided_slice %54 {offsets = [0, 0, 8], sizes = [2, 8, 8], strides = [1, 1, 1]} : vector<2x8x32xf32> to vector<2x8x8xf32>
    "tpu.trace_start"() <{level = 10 : i32, message = "bqd,bkd->bqk"}> : () -> ()
    %cst_30 = arith.constant dense<0.000000e+00> : vector<2x8x8xf32>
    %75 = tpu.matmul %73, %74, %cst_30 {dimension_numbers = #tpu.dot_dimension_numbers<[2], [2], [1], [1], [0, 0, 0, 1, 1, 1], [0], [0]>} : vector<2x8x8xf32>, vector<2x8x8xf32>, vector<2x8x8xf32> -> vector<2x8x8xf32>
    "tpu.trace_stop"() : () -> ()
    %76 = vector.broadcast %18 : vector<1x8x8xf32> to vector<2x8x8xf32>
    %77 = arith.addf %75, %76 : vector<2x8x8xf32>
    %cst_31 = arith.constant dense<0xFF800000> : vector<2x8xf32>
    %78 = vector.multi_reduction <maximumf>, %77, %cst_31 [2] : vector<2x8x8xf32> to vector<2x8xf32>
    %79 = vector.shape_cast %78 : vector<2x8xf32> to vector<2x8x1xf32>
    %80 = vector.broadcast %79 : vector<2x8x1xf32> to vector<2x8x8xf32>
    %81 = arith.subf %77, %80 : vector<2x8x8xf32>
    %82 = math.exp %81 : vector<2x8x8xf32>
    %cst_32 = arith.constant dense<0.000000e+00> : vector<2x8xf32>
    %83 = vector.multi_reduction <add>, %82, %cst_32 [2] : vector<2x8x8xf32> to vector<2x8xf32>
    %84 = vector.shape_cast %83 : vector<2x8xf32> to vector<2x8x1xf32>
    %85 = tpu.reciprocal %84 : vector<2x8x1xf32> -> vector<2x8x1xf32>
    %86 = vector.broadcast %85 : vector<2x8x1xf32> to vector<2x8x8xf32>
    %87 = arith.mulf %82, %86 : vector<2x8x8xf32>
    %88 = vector.extract_strided_slice %55 {offsets = [0, 0, 8], sizes = [2, 8, 8], strides = [1, 1, 1]} : vector<2x8x32xf32> to vector<2x8x8xf32>
    "tpu.trace_start"() <{level = 10 : i32, message = "bqk,bkd->bqd"}> : () -> ()
    %cst_33 = arith.constant dense<0.000000e+00> : vector<2x8x8xf32>
    %89 = tpu.matmul %87, %88, %cst_33 {dimension_numbers = #tpu.dot_dimension_numbers<[2], [1], [1], [2], [0, 0, 0, 1, 1, 2], [0], [0]>} : vector<2x8x8xf32>, vector<2x8x8xf32>, vector<2x8x8xf32> -> vector<2x8x8xf32>
    "tpu.trace_stop"() : () -> ()
    %90 = vector.extract_strided_slice %53 {offsets = [0, 0, 16], sizes = [2, 8, 8], strides = [1, 1, 1]} : vector<2x8x32xf32> to vector<2x8x8xf32>
    %91 = vector.extract_strided_slice %54 {offsets = [0, 0, 16], sizes = [2, 8, 8], strides = [1, 1, 1]} : vector<2x8x32xf32> to vector<2x8x8xf32>
    "tpu.trace_start"() <{level = 10 : i32, message = "bqd,bkd->bqk"}> : () -> ()
    %cst_34 = arith.constant dense<0.000000e+00> : vector<2x8x8xf32>
    %92 = tpu.matmul %90, %91, %cst_34 {dimension_numbers = #tpu.dot_dimension_numbers<[2], [2], [1], [1], [0, 0, 0, 1, 1, 1], [0], [0]>} : vector<2x8x8xf32>, vector<2x8x8xf32>, vector<2x8x8xf32> -> vector<2x8x8xf32>
    "tpu.trace_stop"() : () -> ()
    %93 = vector.broadcast %18 : vector<1x8x8xf32> to vector<2x8x8xf32>
    %94 = arith.addf %92, %93 : vector<2x8x8xf32>
    %cst_35 = arith.constant dense<0xFF800000> : vector<2x8xf32>
    %95 = vector.multi_reduction <maximumf>, %94, %cst_35 [2] : vector<2x8x8xf32> to vector<2x8xf32>
    %96 = vector.shape_cast %95 : vector<2x8xf32> to vector<2x8x1xf32>
    %97 = vector.broadcast %96 : vector<2x8x1xf32> to vector<2x8x8xf32>
    %98 = arith.subf %94, %97 : vector<2x8x8xf32>
    %99 = math.exp %98 : vector<2x8x8xf32>
    %cst_36 = arith.constant dense<0.000000e+00> : vector<2x8xf32>
    %100 = vector.multi_reduction <add>, %99, %cst_36 [2] : vector<2x8x8xf32> to vector<2x8xf32>
    %101 = vector.shape_cast %100 : vector<2x8xf32> to vector<2x8x1xf32>
    %102 = tpu.reciprocal %101 : vector<2x8x1xf32> -> vector<2x8x1xf32>
    %103 = vector.broadcast %102 : vector<2x8x1xf32> to vector<2x8x8xf32>
    %104 = arith.mulf %99, %103 : vector<2x8x8xf32>
    %105 = vector.extract_strided_slice %55 {offsets = [0, 0, 16], sizes = [2, 8, 8], strides = [1, 1, 1]} : vector<2x8x32xf32> to vector<2x8x8xf32>
    "tpu.trace_start"() <{level = 10 : i32, message = "bqk,bkd->bqd"}> : () -> ()
    %cst_37 = arith.constant dense<0.000000e+00> : vector<2x8x8xf32>
    %106 = tpu.matmul %104, %105, %cst_37 {dimension_numbers = #tpu.dot_dimension_numbers<[2], [1], [1], [2], [0, 0, 0, 1, 1, 2], [0], [0]>} : vector<2x8x8xf32>, vector<2x8x8xf32>, vector<2x8x8xf32> -> vector<2x8x8xf32>
    "tpu.trace_stop"() : () -> ()
    %107 = vector.extract_strided_slice %53 {offsets = [0, 0, 24], sizes = [2, 8, 8], strides = [1, 1, 1]} : vector<2x8x32xf32> to vector<2x8x8xf32>
    %108 = vector.extract_strided_slice %54 {offsets = [0, 0, 24], sizes = [2, 8, 8], strides = [1, 1, 1]} : vector<2x8x32xf32> to vector<2x8x8xf32>
    "tpu.trace_start"() <{level = 10 : i32, message = "bqd,bkd->bqk"}> : () -> ()
    %cst_38 = arith.constant dense<0.000000e+00> : vector<2x8x8xf32>
    %109 = tpu.matmul %107, %108, %cst_38 {dimension_numbers = #tpu.dot_dimension_numbers<[2], [2], [1], [1], [0, 0, 0, 1, 1, 1], [0], [0]>} : vector<2x8x8xf32>, vector<2x8x8xf32>, vector<2x8x8xf32> -> vector<2x8x8xf32>
    "tpu.trace_stop"() : () -> ()
    %110 = vector.broadcast %18 : vector<1x8x8xf32> to vector<2x8x8xf32>
    %111 = arith.addf %109, %110 : vector<2x8x8xf32>
    %cst_39 = arith.constant dense<0xFF800000> : vector<2x8xf32>
    %112 = vector.multi_reduction <maximumf>, %111, %cst_39 [2] : vector<2x8x8xf32> to vector<2x8xf32>
    %113 = vector.shape_cast %112 : vector<2x8xf32> to vector<2x8x1xf32>
    %114 = vector.broadcast %113 : vector<2x8x1xf32> to vector<2x8x8xf32>
    %115 = arith.subf %111, %114 : vector<2x8x8xf32>
    %116 = math.exp %115 : vector<2x8x8xf32>
    %cst_40 = arith.constant dense<0.000000e+00> : vector<2x8xf32>
    %117 = vector.multi_reduction <add>, %116, %cst_40 [2] : vector<2x8x8xf32> to vector<2x8xf32>
    %118 = vector.shape_cast %117 : vector<2x8xf32> to vector<2x8x1xf32>
    %119 = tpu.reciprocal %118 : vector<2x8x1xf32> -> vector<2x8x1xf32>
    %120 = vector.broadcast %119 : vector<2x8x1xf32> to vector<2x8x8xf32>
    %121 = arith.mulf %116, %120 : vector<2x8x8xf32>
    %122 = vector.extract_strided_slice %55 {offsets = [0, 0, 24], sizes = [2, 8, 8], strides = [1, 1, 1]} : vector<2x8x32xf32> to vector<2x8x8xf32>
    "tpu.trace_start"() <{level = 10 : i32, message = "bqk,bkd->bqd"}> : () -> ()
    %cst_41 = arith.constant dense<0.000000e+00> : vector<2x8x8xf32>
    %123 = tpu.matmul %121, %122, %cst_41 {dimension_numbers = #tpu.dot_dimension_numbers<[2], [1], [1], [2], [0, 0, 0, 1, 1, 2], [0], [0]>} : vector<2x8x8xf32>, vector<2x8x8xf32>, vector<2x8x8xf32> -> vector<2x8x8xf32>
    "tpu.trace_stop"() : () -> ()
    %124 = tpu.concatenate %72, %89, %106, %123 in 2 : vector<2x8x8xf32>, vector<2x8x8xf32>, vector<2x8x8xf32>, vector<2x8x8xf32> -> vector<2x8x32xf32>
    %125 = vector.shape_cast %124 : vector<2x8x32xf32> to vector<16x32xf32>
    %cst_42 = arith.constant dense<0.000000e+00> : vector<16x32xf32>
    %126 = tpu.matmul %125, %51, %cst_42 {dimension_numbers = #tpu.dot_dimension_numbers<[1], [0], [0], [1], [0, 0, 1, 1], [], []>} : vector<16x32xf32>, vector<32x32xf32>, vector<16x32xf32> -> vector<16x32xf32>
    %127 = vector.broadcast %52 : vector<1x32xf32> to vector<16x32xf32>
    %128 = arith.addf %126, %127 : vector<16x32xf32>
    %129 = arith.addf %0, %128 : vector<16x32xf32>
    %cst_43 = arith.constant dense<0.000000e+00> : vector<16xf32>
    %130 = vector.multi_reduction <add>, %129, %cst_43 [1] : vector<16x32xf32> to vector<16xf32>
    %131 = vector.shape_cast %130 : vector<16xf32> to vector<16x1xf32>
    %cst_44 = arith.constant 3.200000e+01 : f32
    %132 = vector.broadcast %cst_44 : f32 to vector<16x1xf32>
    %133 = arith.divf %131, %132 : vector<16x1xf32>
    %134 = vector.broadcast %133 : vector<16x1xf32> to vector<16x32xf32>
    %135 = arith.subf %129, %134 : vector<16x32xf32>
    %136 = arith.mulf %135, %135 : vector<16x32xf32>
    %cst_45 = arith.constant dense<0.000000e+00> : vector<16xf32>
    %137 = vector.multi_reduction <add>, %136, %cst_45 [1] : vector<16x32xf32> to vector<16xf32>
    %138 = vector.shape_cast %137 : vector<16xf32> to vector<16x1xf32>
    %cst_46 = arith.constant 3.200000e+01 : f32
    %139 = vector.broadcast %cst_46 : f32 to vector<16x1xf32>
    %140 = arith.divf %138, %139 : vector<16x1xf32>
    %141 = vector.broadcast %133 : vector<16x1xf32> to vector<16x32xf32>
    %142 = arith.subf %129, %141 : vector<16x32xf32>
    %cst_47 = arith.constant 9.99999974E-6 : f32
    %143 = vector.broadcast %cst_47 : f32 to vector<16x1xf32>
    %144 = arith.addf %140, %143 : vector<16x1xf32>
    %145 = math.rsqrt %144 : vector<16x1xf32>
    %146 = vector.broadcast %145 : vector<16x1xf32> to vector<16x32xf32>
    %147 = arith.mulf %142, %146 : vector<16x32xf32>
    %148 = vector.broadcast %8 : vector<1x32xf32> to vector<16x32xf32>
    %149 = arith.mulf %147, %148 : vector<16x32xf32>
    %150 = vector.broadcast %9 : vector<1x32xf32> to vector<16x32xf32>
    %151 = arith.addf %149, %150 : vector<16x32xf32>
    %c0_48 = arith.constant 0 : index
    %c256 = arith.constant 256 : index
    %152 = vector.load %arg1[%c0_48, %c256] : memref<32x384xf32, #tpu.memory_space<vmem>>, vector<32x32xf32>
    %cst_49 = arith.constant dense<0.000000e+00> : vector<16x32xf32>
    %153 = tpu.matmul %151, %152, %cst_49 {dimension_numbers = #tpu.dot_dimension_numbers<[1], [0], [0], [1], [0, 0, 1, 1], [], []>} : vector<16x32xf32>, vector<32x32xf32>, vector<16x32xf32> -> vector<16x32xf32>
    %154 = arith.addf %153, %4 : vector<16x32xf32>
    %c0_50 = arith.constant 0 : index
    %c128_51 = arith.constant 128 : index
    %155 = vector.load %arg1[%c0_50, %c128_51] : memref<32x384xf32, #tpu.memory_space<vmem>>, vector<32x64xf32>
    %cst_52 = arith.constant dense<0.000000e+00> : vector<16x64xf32>
    %156 = tpu.matmul %1, %155, %cst_52 {dimension_numbers = #tpu.dot_dimension_numbers<[1], [0], [0], [1], [0, 0, 1, 1], [], []>} : vector<16x32xf32>, vector<32x64xf32>, vector<16x64xf32> -> vector<16x64xf32>
    %157 = vector.extract_strided_slice %156 {offsets = [0, 0], sizes = [16, 32], strides = [1, 1]} : vector<16x64xf32> to vector<16x32xf32>
    %158 = arith.addf %157, %5 : vector<16x32xf32>
    %159 = vector.extract_strided_slice %156 {offsets = [0, 32], sizes = [16, 32], strides = [1, 1]} : vector<16x64xf32> to vector<16x32xf32>
    %c2 = arith.constant 2 : index
    %c32_53 = arith.constant 32 : index
    %160 = vector.load %arg2[%c2, %c32_53] : memref<64x128xf32, #tpu.memory_space<vmem>>, vector<1x32xf32>
    %161 = vector.broadcast %160 : vector<1x32xf32> to vector<16x32xf32>
    %162 = arith.addf %159, %161 : vector<16x32xf32>
    %c0_54 = arith.constant 0 : index
    %c288 = arith.constant 288 : index
    %163 = vector.load %arg1[%c0_54, %c288] : memref<32x384xf32, #tpu.memory_space<vmem>>, vector<32x32xf32>
    %c3 = arith.constant 3 : index
    %c32_55 = arith.constant 32 : index
    %164 = vector.load %arg2[%c3, %c32_55] : memref<64x128xf32, #tpu.memory_space<vmem>>, vector<1x32xf32>
    %165 = vector.shape_cast %154 : vector<16x32xf32> to vector<2x8x32xf32>
    %166 = vector.shape_cast %158 : vector<16x32xf32> to vector<2x8x32xf32>
    %167 = vector.shape_cast %162 : vector<16x32xf32> to vector<2x8x32xf32>
    %168 = vector.extract_strided_slice %165 {offsets = [0, 0, 0], sizes = [2, 8, 8], strides = [1, 1, 1]} : vector<2x8x32xf32> to vector<2x8x8xf32>
    %169 = vector.extract_strided_slice %166 {offsets = [0, 0, 0], sizes = [2, 8, 8], strides = [1, 1, 1]} : vector<2x8x32xf32> to vector<2x8x8xf32>
    "tpu.trace_start"() <{level = 10 : i32, message = "bqd,bkd->bqk"}> : () -> ()
    %cst_56 = arith.constant dense<0.000000e+00> : vector<2x8x8xf32>
    %170 = tpu.matmul %168, %169, %cst_56 {dimension_numbers = #tpu.dot_dimension_numbers<[2], [2], [1], [1], [0, 0, 0, 1, 1, 1], [0], [0]>} : vector<2x8x8xf32>, vector<2x8x8xf32>, vector<2x8x8xf32> -> vector<2x8x8xf32>
    "tpu.trace_stop"() : () -> ()
    %171 = vector.broadcast %18 : vector<1x8x8xf32> to vector<2x8x8xf32>
    %172 = arith.addf %170, %171 : vector<2x8x8xf32>
    %cst_57 = arith.constant dense<0xFF800000> : vector<2x8xf32>
    %173 = vector.multi_reduction <maximumf>, %172, %cst_57 [2] : vector<2x8x8xf32> to vector<2x8xf32>
    %174 = vector.shape_cast %173 : vector<2x8xf32> to vector<2x8x1xf32>
    %175 = vector.broadcast %174 : vector<2x8x1xf32> to vector<2x8x8xf32>
    %176 = arith.subf %172, %175 : vector<2x8x8xf32>
    %177 = math.exp %176 : vector<2x8x8xf32>
    %cst_58 = arith.constant dense<0.000000e+00> : vector<2x8xf32>
    %178 = vector.multi_reduction <add>, %177, %cst_58 [2] : vector<2x8x8xf32> to vector<2x8xf32>
    %179 = vector.shape_cast %178 : vector<2x8xf32> to vector<2x8x1xf32>
    %180 = tpu.reciprocal %179 : vector<2x8x1xf32> -> vector<2x8x1xf32>
    %181 = vector.broadcast %180 : vector<2x8x1xf32> to vector<2x8x8xf32>
    %182 = arith.mulf %177, %181 : vector<2x8x8xf32>
    %183 = vector.extract_strided_slice %167 {offsets = [0, 0, 0], sizes = [2, 8, 8], strides = [1, 1, 1]} : vector<2x8x32xf32> to vector<2x8x8xf32>
    "tpu.trace_start"() <{level = 10 : i32, message = "bqk,bkd->bqd"}> : () -> ()
    %cst_59 = arith.constant dense<0.000000e+00> : vector<2x8x8xf32>
    %184 = tpu.matmul %182, %183, %cst_59 {dimension_numbers = #tpu.dot_dimension_numbers<[2], [1], [1], [2], [0, 0, 0, 1, 1, 2], [0], [0]>} : vector<2x8x8xf32>, vector<2x8x8xf32>, vector<2x8x8xf32> -> vector<2x8x8xf32>
    "tpu.trace_stop"() : () -> ()
    %185 = vector.extract_strided_slice %165 {offsets = [0, 0, 8], sizes = [2, 8, 8], strides = [1, 1, 1]} : vector<2x8x32xf32> to vector<2x8x8xf32>
    %186 = vector.extract_strided_slice %166 {offsets = [0, 0, 8], sizes = [2, 8, 8], strides = [1, 1, 1]} : vector<2x8x32xf32> to vector<2x8x8xf32>
    "tpu.trace_start"() <{level = 10 : i32, message = "bqd,bkd->bqk"}> : () -> ()
    %cst_60 = arith.constant dense<0.000000e+00> : vector<2x8x8xf32>
    %187 = tpu.matmul %185, %186, %cst_60 {dimension_numbers = #tpu.dot_dimension_numbers<[2], [2], [1], [1], [0, 0, 0, 1, 1, 1], [0], [0]>} : vector<2x8x8xf32>, vector<2x8x8xf32>, vector<2x8x8xf32> -> vector<2x8x8xf32>
    "tpu.trace_stop"() : () -> ()
    %188 = vector.broadcast %18 : vector<1x8x8xf32> to vector<2x8x8xf32>
    %189 = arith.addf %187, %188 : vector<2x8x8xf32>
    %cst_61 = arith.constant dense<0xFF800000> : vector<2x8xf32>
    %190 = vector.multi_reduction <maximumf>, %189, %cst_61 [2] : vector<2x8x8xf32> to vector<2x8xf32>
    %191 = vector.shape_cast %190 : vector<2x8xf32> to vector<2x8x1xf32>
    %192 = vector.broadcast %191 : vector<2x8x1xf32> to vector<2x8x8xf32>
    %193 = arith.subf %189, %192 : vector<2x8x8xf32>
    %194 = math.exp %193 : vector<2x8x8xf32>
    %cst_62 = arith.constant dense<0.000000e+00> : vector<2x8xf32>
    %195 = vector.multi_reduction <add>, %194, %cst_62 [2] : vector<2x8x8xf32> to vector<2x8xf32>
    %196 = vector.shape_cast %195 : vector<2x8xf32> to vector<2x8x1xf32>
    %197 = tpu.reciprocal %196 : vector<2x8x1xf32> -> vector<2x8x1xf32>
    %198 = vector.broadcast %197 : vector<2x8x1xf32> to vector<2x8x8xf32>
    %199 = arith.mulf %194, %198 : vector<2x8x8xf32>
    %200 = vector.extract_strided_slice %167 {offsets = [0, 0, 8], sizes = [2, 8, 8], strides = [1, 1, 1]} : vector<2x8x32xf32> to vector<2x8x8xf32>
    "tpu.trace_start"() <{level = 10 : i32, message = "bqk,bkd->bqd"}> : () -> ()
    %cst_63 = arith.constant dense<0.000000e+00> : vector<2x8x8xf32>
    %201 = tpu.matmul %199, %200, %cst_63 {dimension_numbers = #tpu.dot_dimension_numbers<[2], [1], [1], [2], [0, 0, 0, 1, 1, 2], [0], [0]>} : vector<2x8x8xf32>, vector<2x8x8xf32>, vector<2x8x8xf32> -> vector<2x8x8xf32>
    "tpu.trace_stop"() : () -> ()
    %202 = vector.extract_strided_slice %165 {offsets = [0, 0, 16], sizes = [2, 8, 8], strides = [1, 1, 1]} : vector<2x8x32xf32> to vector<2x8x8xf32>
    %203 = vector.extract_strided_slice %166 {offsets = [0, 0, 16], sizes = [2, 8, 8], strides = [1, 1, 1]} : vector<2x8x32xf32> to vector<2x8x8xf32>
    "tpu.trace_start"() <{level = 10 : i32, message = "bqd,bkd->bqk"}> : () -> ()
    %cst_64 = arith.constant dense<0.000000e+00> : vector<2x8x8xf32>
    %204 = tpu.matmul %202, %203, %cst_64 {dimension_numbers = #tpu.dot_dimension_numbers<[2], [2], [1], [1], [0, 0, 0, 1, 1, 1], [0], [0]>} : vector<2x8x8xf32>, vector<2x8x8xf32>, vector<2x8x8xf32> -> vector<2x8x8xf32>
    "tpu.trace_stop"() : () -> ()
    %205 = vector.broadcast %18 : vector<1x8x8xf32> to vector<2x8x8xf32>
    %206 = arith.addf %204, %205 : vector<2x8x8xf32>
    %cst_65 = arith.constant dense<0xFF800000> : vector<2x8xf32>
    %207 = vector.multi_reduction <maximumf>, %206, %cst_65 [2] : vector<2x8x8xf32> to vector<2x8xf32>
    %208 = vector.shape_cast %207 : vector<2x8xf32> to vector<2x8x1xf32>
    %209 = vector.broadcast %208 : vector<2x8x1xf32> to vector<2x8x8xf32>
    %210 = arith.subf %206, %209 : vector<2x8x8xf32>
    %211 = math.exp %210 : vector<2x8x8xf32>
    %cst_66 = arith.constant dense<0.000000e+00> : vector<2x8xf32>
    %212 = vector.multi_reduction <add>, %211, %cst_66 [2] : vector<2x8x8xf32> to vector<2x8xf32>
    %213 = vector.shape_cast %212 : vector<2x8xf32> to vector<2x8x1xf32>
    %214 = tpu.reciprocal %213 : vector<2x8x1xf32> -> vector<2x8x1xf32>
    %215 = vector.broadcast %214 : vector<2x8x1xf32> to vector<2x8x8xf32>
    %216 = arith.mulf %211, %215 : vector<2x8x8xf32>
    %217 = vector.extract_strided_slice %167 {offsets = [0, 0, 16], sizes = [2, 8, 8], strides = [1, 1, 1]} : vector<2x8x32xf32> to vector<2x8x8xf32>
    "tpu.trace_start"() <{level = 10 : i32, message = "bqk,bkd->bqd"}> : () -> ()
    %cst_67 = arith.constant dense<0.000000e+00> : vector<2x8x8xf32>
    %218 = tpu.matmul %216, %217, %cst_67 {dimension_numbers = #tpu.dot_dimension_numbers<[2], [1], [1], [2], [0, 0, 0, 1, 1, 2], [0], [0]>} : vector<2x8x8xf32>, vector<2x8x8xf32>, vector<2x8x8xf32> -> vector<2x8x8xf32>
    "tpu.trace_stop"() : () -> ()
    %219 = vector.extract_strided_slice %165 {offsets = [0, 0, 24], sizes = [2, 8, 8], strides = [1, 1, 1]} : vector<2x8x32xf32> to vector<2x8x8xf32>
    %220 = vector.extract_strided_slice %166 {offsets = [0, 0, 24], sizes = [2, 8, 8], strides = [1, 1, 1]} : vector<2x8x32xf32> to vector<2x8x8xf32>
    "tpu.trace_start"() <{level = 10 : i32, message = "bqd,bkd->bqk"}> : () -> ()
    %cst_68 = arith.constant dense<0.000000e+00> : vector<2x8x8xf32>
    %221 = tpu.matmul %219, %220, %cst_68 {dimension_numbers = #tpu.dot_dimension_numbers<[2], [2], [1], [1], [0, 0, 0, 1, 1, 1], [0], [0]>} : vector<2x8x8xf32>, vector<2x8x8xf32>, vector<2x8x8xf32> -> vector<2x8x8xf32>
    "tpu.trace_stop"() : () -> ()
    %222 = vector.broadcast %18 : vector<1x8x8xf32> to vector<2x8x8xf32>
    %223 = arith.addf %221, %222 : vector<2x8x8xf32>
    %cst_69 = arith.constant dense<0xFF800000> : vector<2x8xf32>
    %224 = vector.multi_reduction <maximumf>, %223, %cst_69 [2] : vector<2x8x8xf32> to vector<2x8xf32>
    %225 = vector.shape_cast %224 : vector<2x8xf32> to vector<2x8x1xf32>
    %226 = vector.broadcast %225 : vector<2x8x1xf32> to vector<2x8x8xf32>
    %227 = arith.subf %223, %226 : vector<2x8x8xf32>
    %228 = math.exp %227 : vector<2x8x8xf32>
    %cst_70 = arith.constant dense<0.000000e+00> : vector<2x8xf32>
    %229 = vector.multi_reduction <add>, %228, %cst_70 [2] : vector<2x8x8xf32> to vector<2x8xf32>
    %230 = vector.shape_cast %229 : vector<2x8xf32> to vector<2x8x1xf32>
    %231 = tpu.reciprocal %230 : vector<2x8x1xf32> -> vector<2x8x1xf32>
    %232 = vector.broadcast %231 : vector<2x8x1xf32> to vector<2x8x8xf32>
    %233 = arith.mulf %228, %232 : vector<2x8x8xf32>
    %234 = vector.extract_strided_slice %167 {offsets = [0, 0, 24], sizes = [2, 8, 8], strides = [1, 1, 1]} : vector<2x8x32xf32> to vector<2x8x8xf32>
    "tpu.trace_start"() <{level = 10 : i32, message = "bqk,bkd->bqd"}> : () -> ()
    %cst_71 = arith.constant dense<0.000000e+00> : vector<2x8x8xf32>
    %235 = tpu.matmul %233, %234, %cst_71 {dimension_numbers = #tpu.dot_dimension_numbers<[2], [1], [1], [2], [0, 0, 0, 1, 1, 2], [0], [0]>} : vector<2x8x8xf32>, vector<2x8x8xf32>, vector<2x8x8xf32> -> vector<2x8x8xf32>
    "tpu.trace_stop"() : () -> ()
    %236 = tpu.concatenate %184, %201, %218, %235 in 2 : vector<2x8x8xf32>, vector<2x8x8xf32>, vector<2x8x8xf32>, vector<2x8x8xf32> -> vector<2x8x32xf32>
    %237 = vector.shape_cast %236 : vector<2x8x32xf32> to vector<16x32xf32>
    %cst_72 = arith.constant dense<0.000000e+00> : vector<16x32xf32>
    %238 = tpu.matmul %237, %163, %cst_72 {dimension_numbers = #tpu.dot_dimension_numbers<[1], [0], [0], [1], [0, 0, 1, 1], [], []>} : vector<16x32xf32>, vector<32x32xf32>, vector<16x32xf32> -> vector<16x32xf32>
    %239 = vector.broadcast %164 : vector<1x32xf32> to vector<16x32xf32>
    %240 = arith.addf %238, %239 : vector<16x32xf32>
    %241 = arith.addf %129, %240 : vector<16x32xf32>
    %cst_73 = arith.constant dense<0.000000e+00> : vector<16xf32>
    %242 = vector.multi_reduction <add>, %241, %cst_73 [1] : vector<16x32xf32> to vector<16xf32>
    %243 = vector.shape_cast %242 : vector<16xf32> to vector<16x1xf32>
    %cst_74 = arith.constant 3.200000e+01 : f32
    %244 = vector.broadcast %cst_74 : f32 to vector<16x1xf32>
    %245 = arith.divf %243, %244 : vector<16x1xf32>
    %246 = vector.broadcast %245 : vector<16x1xf32> to vector<16x32xf32>
    %247 = arith.subf %241, %246 : vector<16x32xf32>
    %248 = arith.mulf %247, %247 : vector<16x32xf32>
    %cst_75 = arith.constant dense<0.000000e+00> : vector<16xf32>
    %249 = vector.multi_reduction <add>, %248, %cst_75 [1] : vector<16x32xf32> to vector<16xf32>
    %250 = vector.shape_cast %249 : vector<16xf32> to vector<16x1xf32>
    %cst_76 = arith.constant 3.200000e+01 : f32
    %251 = vector.broadcast %cst_76 : f32 to vector<16x1xf32>
    %252 = arith.divf %250, %251 : vector<16x1xf32>
    %253 = vector.broadcast %245 : vector<16x1xf32> to vector<16x32xf32>
    %254 = arith.subf %241, %253 : vector<16x32xf32>
    %cst_77 = arith.constant 9.99999974E-6 : f32
    %255 = vector.broadcast %cst_77 : f32 to vector<16x1xf32>
    %256 = arith.addf %252, %255 : vector<16x1xf32>
    %257 = math.rsqrt %256 : vector<16x1xf32>
    %258 = vector.broadcast %257 : vector<16x1xf32> to vector<16x32xf32>
    %259 = arith.mulf %254, %258 : vector<16x32xf32>
    %260 = vector.broadcast %10 : vector<1x32xf32> to vector<16x32xf32>
    %261 = arith.mulf %259, %260 : vector<16x32xf32>
    %262 = vector.broadcast %11 : vector<1x32xf32> to vector<16x32xf32>
    %263 = arith.addf %261, %262 : vector<16x32xf32>
    %c0_78 = arith.constant 0 : index
    %c192 = arith.constant 192 : index
    %264 = vector.load %arg1[%c0_78, %c192] : memref<32x384xf32, #tpu.memory_space<vmem>>, vector<32x64xf32>
    %cst_79 = arith.constant dense<0.000000e+00> : vector<16x64xf32>
    %265 = tpu.matmul %263, %264, %cst_79 {dimension_numbers = #tpu.dot_dimension_numbers<[1], [0], [0], [1], [0, 0, 1, 1], [], []>} : vector<16x32xf32>, vector<32x64xf32>, vector<16x64xf32> -> vector<16x64xf32>
    %c0_80 = arith.constant 0 : index
    %c64_81 = arith.constant 64 : index
    %266 = vector.load %arg2[%c0_80, %c64_81] : memref<64x128xf32, #tpu.memory_space<vmem>>, vector<1x64xf32>
    %267 = vector.broadcast %266 : vector<1x64xf32> to vector<16x64xf32>
    %268 = arith.addf %265, %267 : vector<16x64xf32>
    %cst_82 = arith.constant 0.000000e+00 : f32
    %269 = vector.broadcast %cst_82 : f32 to vector<16x64xf32>
    %270 = arith.maximumf %268, %269 : vector<16x64xf32>
    %c0_83 = arith.constant 0 : index
    %c0_84 = arith.constant 0 : index
    %271 = vector.load %arg2[%c0_83, %c0_84] : memref<64x128xf32, #tpu.memory_space<vmem>>, vector<64x32xf32>
    %cst_85 = arith.constant dense<0.000000e+00> : vector<16x32xf32>
    %272 = tpu.matmul %270, %271, %cst_85 {dimension_numbers = #tpu.dot_dimension_numbers<[1], [0], [0], [1], [0, 0, 1, 1], [], []>} : vector<16x64xf32>, vector<64x32xf32>, vector<16x32xf32> -> vector<16x32xf32>
    %c4 = arith.constant 4 : index
    %c32_86 = arith.constant 32 : index
    %273 = vector.load %arg2[%c4, %c32_86] : memref<64x128xf32, #tpu.memory_space<vmem>>, vector<1x32xf32>
    %274 = vector.broadcast %273 : vector<1x32xf32> to vector<16x32xf32>
    %275 = arith.addf %272, %274 : vector<16x32xf32>
    %276 = arith.addf %241, %275 : vector<16x32xf32>
    %c0_87 = arith.constant 0 : index
    %c0_88 = arith.constant 0 : index
    %277 = vector.load %arg3[%c0_87, %c0_88] : memref<16x32xf32, #tpu.memory_space<vmem>>, vector<16x32xf32>
    tpu.vector_store %arg3[%c0_87, %c0_88], %276 {strides = array<i32>} : memref<16x32xf32, #tpu.memory_space<vmem>>, vector<16x32xf32>,
    return
  }
}

</mosaic_0001>

<llo_original>
// kernel: act_decoder_layer.1
$region0: #{act_decoder_layer.1}
  #allocation0 [shape = 'u32[]', space=smem, size = 0x4, offset = 0x4, fixed_abs, tag = 'smem constant byte address 0x4 - core index']
  #allocation1 [shape = 'u32[72,128]{1,0:T(1,128)}', space=vmem, size = 0x9000, scoped, tag = 'internal scratch']
  %s0 = inlined_call_operand.vmem [shape: f32[16,256], index: 0, kind: input, shape index: {}]
  %s1 = inlined_call_operand.vmem [shape: f32[32,384], index: 1, kind: input, shape index: {}]
  %s2 = inlined_call_operand.vmem [shape: f32[64,128], index: 2, kind: input, shape index: {}]
  %s3 = inlined_call_operand.hbm [shape: f32[16,32], index: 3, kind: output, shape index: {}]
  %s4 = sld [smem:[#allocation0]]
  $region22: #{act_decoder_layer.1} parent=0
    _
  %s6 = ssub.s32 1, %s4
  %s7 = scalar_select 0, %s6, %s4
  $region1: #{act_decoder_layer.1} parent=0
    #allocation2 [shape = 'u8[8192]{0}', space=vmem, size = 0x2000, scoped, tag = 'output window, operand 0, single buffered']
    #allocation3 [shape = 's32[1]{0}', space=sflag, size = 0x4, scoped, tag = 'scoped memory for act_decoder_layer.1']
    %8 = vsyncpa [#allocation3], 0
    // Predicated region
    $region2: #{act_decoder_layer.1} parent=1 // pred_check
      _
    $region3: #{act_decoder_layer.1} parent=1 // pred_check_branch
      %10 = sbr.rel (0) target = $region5
    $region4: #{act_decoder_layer.1} parent=1 // pred_region
      _
    $region5: #{act_decoder_layer.1} parent=1 // pred_fallthru
      _
    // Predicated region
    $region6: #{act_decoder_layer.1} parent=1 // pred_check
      _
    $region7: #{act_decoder_layer.1} parent=1 // pred_check_branch
      %12 = sbr.rel (0) target = $region9
    $region8: #{act_decoder_layer.1} parent=1 // pred_region
      _
    $region9: #{act_decoder_layer.1} parent=1 // pred_fallthru
      _
    // Predicated region
    $region10: #{act_decoder_layer.1} parent=1 // pred_check
      _
    $region11: #{act_decoder_layer.1} parent=1 // pred_check_branch
      %14 = sbr.rel (0) target = $region13
    $region12: #{act_decoder_layer.1} parent=1 // pred_region
      _
    $region13: #{act_decoder_layer.1} parent=1 // pred_fallthru
      _
    %v15 = vld [vmem:[%s0] sm:$0xff]
    %v16 = vld [vmem:[%s0 + $0x10] sm:$0xff]
    %v17 = vld [vmem:[%s0 + $0x8] sm:$0xff]
    %v18 = vld [vmem:[%s0 + $0x18] sm:$0xff]
    %v19 = vld [vmem:[%s2 + $0x5] sm:$0x1]
    %v20 = vld [vmem:[%s2 + $0x6] sm:$0x1]
    %v21 = vld [vmem:[%s2 + $0x7] sm:$0x1]
    %v22 = vld [vmem:[%s2 + $0x8] sm:$0x1]
    %v23 = vld [vmem:[%s2 + $0x9] sm:$0x1]
    %v24 = vld [vmem:[%s2 + $0xa] sm:$0x1]
    %v25 = vlaneseq
    %v26 = vshrl.u32 %v25, 7
    %v27 = vlaneseq
    %v28 = vand.u32 %v27, 127
    %vm29 = vcmp.le.s32.totalorder %v28, %v26
    %v30 = vsel %vm29, 0.0, -1e+30
    %vm31 = vcmask 261120
    %v32 = vsel %vm31, %v15, 0.0
    %33 = vadd.xlane.f32.xlu0 %v32
    %v34 = vpop.xlane.xlu0 %33
    %v35 = vsel %vm31, %v16, 0.0
    %36 = vadd.xlane.f32.xlu0 %v35
    %v37 = vpop.xlane.xlu0 %36
    %v38 = vrcp.pop 32.0
    %v39 = vmul.f32 32.0, %v38
    %v40 = vsub.f32 1.0, %v39
    %v41 = vmul.f32 %v38, %v40
    %v42 = vadd.f32 %v38, %v41
    %vm43 = vweird.f32 %v38
    %v44 = vsel %vm43, %v38, %v42
    %v45 = vmul.f32 %v34, %v44
    %v46 = vmul.f32 %v37, %v44
    %v47 = vsub.f32 %v15, %v45
    %v48 = vsub.f32 %v16, %v46
    %v49 = vmul.f32 %v47, %v47
    %v50 = vmul.f32 %v48, %v48
    %v51 = vsel %vm31, %v49, 0.0
    %52 = vadd.xlane.f32.xlu0 %v51
    %v53 = vpop.xlane.xlu0 %52
    %v54 = vsel %vm31, %v50, 0.0
    %55 = vadd.xlane.f32.xlu0 %v54
    %v56 = vpop.xlane.xlu0 %55
    %v57 = vmul.f32 %v53, %v44
    %v58 = vmul.f32 %v56, %v44
    %v59 = vadd.f32 %v57, 1e-05
    %v60 = vadd.f32 %v58, 1e-05
    %v61 = vrsqrt.pop %v59
    %v62 = vmul.f32 %v61, %v59
    %v63 = vmul.f32 %v62, %v61
    %v64 = vmul.f32 0.5, %v63
    %v65 = vsub.f32 1.5, %v64
    %v66 = vmul.f32 %v61, %v65
    %vm67 = vweird.f32 %v59
    %vm68 = vweird.f32 %v61
    %vm69 = vmor %vm67, %vm68
    %v70 = vsel %vm69, %v61, %v66
    %v71 = vrsqrt.pop %v60
    %v72 = vmul.f32 %v71, %v60
    %v73 = vmul.f32 %v72, %v71
    %v74 = vmul.f32 0.5, %v73
    %v75 = vsub.f32 1.5, %v74
    %v76 = vmul.f32 %v71, %v75
    %vm77 = vweird.f32 %v60
    %vm78 = vweird.f32 %v71
    %vm79 = vmor %vm77, %vm78
    %v80 = vsel %vm79, %v71, %v76
    %v81 = vmul.f32 %v47, %v70
    %v82 = vmul.f32 %v48, %v80
    %v83 = vperm.slane %v19, 0
    %85 = vrot.lane.b32.xlu0 %v83, 96
    %v86 = vpop.permute.xlu0 %85
    %v88 = vmul.f32 %v81, %v86
    %v89 = vmul.f32 %v82, %v86
    %v90 = vperm.slane %v20, 0
    %92 = vrot.lane.b32.xlu0 %v90, 96
    %v93 = vpop.permute.xlu0 %92
    %v95 = vadd.f32 %v88, %v93
    %v96 = vadd.f32 %v89, %v93
    %v97 = vld [vmem:[%s1] sm:$0xff]
    %v98 = vld [vmem:[%s1 + $0x18] sm:$0xff]
    %v99 = vld [vmem:[%s1 + $0x30] sm:$0xff]
    %v100 = vld [vmem:[%s1 + $0x48] sm:$0xff]
    %v102 = vsel %vm31, %v95, 0
    %v105 = vsel %vm31, %v96, 0
    %107 = vmatpush.msra.mxu0 0.0
    %108 = vmatpush.msra.mxu0 0.0
    %109 = vmatpush.msra.mxu0 0.0
    %110 = vmatpush.msra.mxu0 0.0
    %111 = vmatpush.msra.mxu0 0.0
    %112 = vmatpush.msra.mxu0 0.0
    %113 = vmatpush.msra.mxu0 0.0
    %114 = vmatpush.msra.mxu0 0.0
    %115 = vmatpush.msra.mxu0 0.0
    %116 = vmatpush.msra.mxu0 0.0
    %117 = vmatpush.msra.mxu0 0.0
    %118 = vmatpush.msra.mxu0 0.0
    %119 = vmatpush.msra.mxu0 %v100
    %120 = vmatpush.msra.mxu0 %v99
    %121 = vmatpush.msra.mxu0 %v98
    %122 = vmatpush.msra.mxu0 %v97
    %123 = vmatmul.f32.gmra.mxu0 %v102
    %v124 = vpop.f32.mrf.mxu0
    %v125 = vadd.f32 0.0, %v124
    %126 = vmatmul.f32.gmra.mxu0 %v105
    %v127 = vpop.f32.mrf.mxu0
    %v128 = vadd.f32 0.0, %v127
    %129 = vdwg.mxu0
    %132 = vrot.lane.b32.xlu0 %v15, 64
    %v133 = vpop.permute.xlu0 %132
    %134 = vrot.lane.b32.xlu0 %v16, 64
    %v135 = vpop.permute.xlu0 %134
    %v138 = vadd.f32 %v125, %v133
    %v139 = vadd.f32 %v128, %v135
    %v140 = vld [vmem:[%s2] sm:$0x1]
    %v141 = vperm.slane %v140, 0
    %143 = vrot.lane.b32.xlu0 %v141, 32
    %v144 = vpop.permute.xlu0 %143
    %v146 = vadd.f32 %v125, %v144
    %v147 = vadd.f32 %v128, %v144
    %v148 = vld [vmem:[%s2 + $0x1] sm:$0x1]
    %150 = vrot.lane.b32.xlu0 %v138, 96
    %v151 = vpop.permute.xlu0 %150
    %vm152 = vcmask 64512
    %v153 = vsel %vm152, %v138, 0
    %v155 = vsel %vm152, %v151, 0
    %157 = vmatpush.xpose.msra.mxu0 0.0
    %158 = vmatpush.xpose.msra.mxu0 0.0
    %159 = vmatpush.xpose.msra.mxu0 0.0
    %160 = vmatpush.xpose.msra.mxu0 0.0
    %161 = vmatpush.xpose.msra.mxu0 0.0
    %162 = vmatpush.xpose.msra.mxu0 0.0
    %163 = vmatpush.xpose.msra.mxu0 0.0
    %164 = vmatpush.xpose.msra.mxu0 0.0
    %165 = vmatpush.xpose.msra.mxu0 0.0
    %166 = vmatpush.xpose.msra.mxu0 0.0
    %167 = vmatpush.xpose.msra.mxu0 0.0
    %168 = vmatpush.xpose.msra.mxu0 0.0
    %169 = vmatpush.xpose.msra.mxu0 0.0
    %170 = vmatpush.xpose.msra.mxu0 0.0
    %171 = vmatpush.xpose.msra.mxu0 0.0
    %172 = vmatpush.xpose.msra.mxu0 %v155
    %173 = vmatmul.f32.gmra.mxu0 %v153
    %v174 = vpop.f32.mrf.mxu0
    %v175 = vadd.f32 %v30, %v174
    %176 = vdwg.mxu0
    %178 = vrot.lane.b32.xlu0 %v139, 96
    %v179 = vpop.permute.xlu0 %178
    %v180 = vsel %vm152, %v139, 0
    %v182 = vsel %vm152, %v179, 0
    %184 = vmatpush.xpose.msra.mxu0 0.0
    %185 = vmatpush.xpose.msra.mxu0 0.0
    %186 = vmatpush.xpose.msra.mxu0 0.0
    %187 = vmatpush.xpose.msra.mxu0 0.0
    %188 = vmatpush.xpose.msra.mxu0 0.0
    %189 = vmatpush.xpose.msra.mxu0 0.0
    %190 = vmatpush.xpose.msra.mxu0 0.0
    %191 = vmatpush.xpose.msra.mxu0 0.0
    %192 = vmatpush.xpose.msra.mxu0 0.0
    %193 = vmatpush.xpose.msra.mxu0 0.0
    %194 = vmatpush.xpose.msra.mxu0 0.0
    %195 = vmatpush.xpose.msra.mxu0 0.0
    %196 = vmatpush.xpose.msra.mxu0 0.0
    %197 = vmatpush.xpose.msra.mxu0 0.0
    %198 = vmatpush.xpose.msra.mxu0 0.0
    %199 = vmatpush.xpose.msra.mxu0 %v182
    %200 = vmatmul.f32.gmra.mxu0 %v180
    %v201 = vpop.f32.mrf.mxu0
    %v202 = vadd.f32 %v30, %v201
    %203 = vdwg.mxu0
    %v204 = vsel %vm152, %v175, -inf
    %205 = vmax.xlane.f32.xlu0 %v204
    %v206 = vpop.xlane.xlu0 %205
    %v207 = vsel %vm152, %v202, -inf
    %208 = vmax.xlane.f32.xlu0 %v207
    %v209 = vpop.xlane.xlu0 %208
    %v210 = vsub.f32 %v175, %v206
    %v211 = vsub.f32 %v202, %v209
    %v212 = vmul.f32 %v210, 1.442695
    %v213 = vpow.pop %v212
    %v214 = vmul.f32 %v211, 1.442695
    %v215 = vpow.pop %v214
    %v216 = vsel %vm152, %v213, 0.0
    %217 = vadd.xlane.f32.xlu0 %v216
    %v218 = vpop.xlane.xlu0 %217
    %v219 = vsel %vm152, %v215, 0.0
    %220 = vadd.xlane.f32.xlu0 %v219
    %v221 = vpop.xlane.xlu0 %220
    %v222 = vrcp.pop %v218
    %v223 = vmul.f32 %v218, %v222
    %v224 = vsub.f32 1.0, %v223
    %v225 = vmul.f32 %v222, %v224
    %v226 = vadd.f32 %v222, %v225
    %vm227 = vweird.f32 %v218
    %vm228 = vweird.f32 %v222
    %vm229 = vmor %vm227, %vm228
    %v230 = vsel %vm229, %v222, %v226
    %v231 = vand.u32 2147483647, %v218
    %vm232 = vcmp.eq.f32.partialorder %v231, 8.507059e+37
    %v233 = vand.u32 %v218, 2147483648
    %v234 = vor.u32 1.1754944e-38, %v233
    %v235 = vsel %vm232, %v234, %v230
    %v236 = vrcp.pop %v221
    %v237 = vmul.f32 %v221, %v236
    %v238 = vsub.f32 1.0, %v237
    %v239 = vmul.f32 %v236, %v238
    %v240 = vadd.f32 %v236, %v239
    %vm241 = vweird.f32 %v221
    %vm242 = vweird.f32 %v236
    %vm243 = vmor %vm241, %vm242
    %v244 = vsel %vm243, %v236, %v240
    %v245 = vand.u32 2147483647, %v221
    %vm246 = vcmp.eq.f32.partialorder %v245, 8.507059e+37
    %v247 = vand.u32 %v221, 2147483648
    %v248 = vor.u32 1.1754944e-38, %v247
    %v249 = vsel %vm246, %v248, %v244
    %v250 = vmul.f32 %v213, %v235
    %v251 = vmul.f32 %v215, %v249
    %253 = vrot.lane.b32.xlu0 %v146, 64
    %v254 = vpop.permute.xlu0 %253
    %v257 = vsel %vm152, %v250, 0
    %259 = vmatpush.msra.mxu0 0.0
    %260 = vmatpush.msra.mxu0 0.0
    %261 = vmatpush.msra.mxu0 0.0
    %262 = vmatpush.msra.mxu0 0.0
    %263 = vmatpush.msra.mxu0 0.0
    %264 = vmatpush.msra.mxu0 0.0
    %265 = vmatpush.msra.mxu0 0.0
    %266 = vmatpush.msra.mxu0 0.0
    %267 = vmatpush.msra.mxu0 0.0
    %268 = vmatpush.msra.mxu0 0.0
    %269 = vmatpush.msra.mxu0 0.0
    %270 = vmatpush.msra.mxu0 0.0
    %271 = vmatpush.msra.mxu0 0.0
    %272 = vmatpush.msra.mxu0 0.0
    %273 = vmatpush.msra.mxu0 0.0
    %274 = vmatpush.msra.mxu0 %v254
    %275 = vmatmul.f32.gmra.mxu0 %v257
    %v276 = vpop.f32.mrf.mxu0
    %v277 = vadd.f32 0.0, %v276
    %278 = vdwg.mxu0
    %280 = vrot.lane.b32.xlu0 %v147, 64
    %v281 = vpop.permute.xlu0 %280
    %v284 = vsel %vm152, %v251, 0
    %286 = vmatpush.msra.mxu0 0.0
    %287 = vmatpush.msra.mxu0 0.0
    %288 = vmatpush.msra.mxu0 0.0
    %289 = vmatpush.msra.mxu0 0.0
    %290 = vmatpush.msra.mxu0 0.0
    %291 = vmatpush.msra.mxu0 0.0
    %292 = vmatpush.msra.mxu0 0.0
    %293 = vmatpush.msra.mxu0 0.0
    %294 = vmatpush.msra.mxu0 0.0
    %295 = vmatpush.msra.mxu0 0.0
    %296 = vmatpush.msra.mxu0 0.0
    %297 = vmatpush.msra.mxu0 0.0
    %298 = vmatpush.msra.mxu0 0.0
    %299 = vmatpush.msra.mxu0 0.0
    %300 = vmatpush.msra.mxu0 0.0
    %301 = vmatpush.msra.mxu0 %v281
    %302 = vmatmul.f32.gmra.mxu0 %v284
    %v303 = vpop.f32.mrf.mxu0
    %v304 = vadd.f32 0.0, %v303
    %305 = vdwg.mxu0
    %306 = vrot.lane.b32.xlu0 %v138, 120
    %v307 = vpop.permute.xlu0 %306
    %308 = vrot.lane.b32.xlu0 %v138, 88
    %v309 = vpop.permute.xlu0 %308
    %v310 = vsel %vm152, %v307, 0
    %v312 = vsel %vm152, %v309, 0
    %314 = vmatpush.xpose.msra.mxu0 0.0
    %315 = vmatpush.xpose.msra.mxu0 0.0
    %316 = vmatpush.xpose.msra.mxu0 0.0
    %317 = vmatpush.xpose.msra.mxu0 0.0
    %318 = vmatpush.xpose.msra.mxu0 0.0
    %319 = vmatpush.xpose.msra.mxu0 0.0
    %320 = vmatpush.xpose.msra.mxu0 0.0
    %321 = vmatpush.xpose.msra.mxu0 0.0
    %322 = vmatpush.xpose.msra.mxu0 0.0
    %323 = vmatpush.xpose.msra.mxu0 0.0
    %324 = vmatpush.xpose.msra.mxu0 0.0
    %325 = vmatpush.xpose.msra.mxu0 0.0
    %326 = vmatpush.xpose.msra.mxu0 0.0
    %327 = vmatpush.xpose.msra.mxu0 0.0
    %328 = vmatpush.xpose.msra.mxu0 0.0
    %329 = vmatpush.xpose.msra.mxu0 %v312
    %330 = vmatmul.f32.gmra.mxu0 %v310
    %v331 = vpop.f32.mrf.mxu0
    %v332 = vadd.f32 %v30, %v331
    %333 = vdwg.mxu0
    %334 = vrot.lane.b32.xlu0 %v139, 120
    %v335 = vpop.permute.xlu0 %334
    %336 = vrot.lane.b32.xlu0 %v139, 88
    %v337 = vpop.permute.xlu0 %336
    %v338 = vsel %vm152, %v335, 0
    %v340 = vsel %vm152, %v337, 0
    %342 = vmatpush.xpose.msra.mxu0 0.0
    %343 = vmatpush.xpose.msra.mxu0 0.0
    %344 = vmatpush.xpose.msra.mxu0 0.0
    %345 = vmatpush.xpose.msra.mxu0 0.0
    %346 = vmatpush.xpose.msra.mxu0 0.0
    %347 = vmatpush.xpose.msra.mxu0 0.0
    %348 = vmatpush.xpose.msra.mxu0 0.0
    %349 = vmatpush.xpose.msra.mxu0 0.0
    %350 = vmatpush.xpose.msra.mxu0 0.0
    %351 = vmatpush.xpose.msra.mxu0 0.0
    %352 = vmatpush.xpose.msra.mxu0 0.0
    %353 = vmatpush.xpose.msra.mxu0 0.0
    %354 = vmatpush.xpose.msra.mxu0 0.0
    %355 = vmatpush.xpose.msra.mxu0 0.0
    %356 = vmatpush.xpose.msra.mxu0 0.0
    %357 = vmatpush.xpose.msra.mxu0 %v340
    %358 = vmatmul.f32.gmra.mxu0 %v338
    %v359 = vpop.f32.mrf.mxu0
    %v360 = vadd.f32 %v30, %v359
    %361 = vdwg.mxu0
    %v362 = vsel %vm152, %v332, -inf
    %363 = vmax.xlane.f32.xlu0 %v362
    %v364 = vpop.xlane.xlu0 %363
    %v365 = vsel %vm152, %v360, -inf
    %366 = vmax.xlane.f32.xlu0 %v365
    %v367 = vpop.xlane.xlu0 %366
    %v368 = vsub.f32 %v332, %v364
    %v369 = vsub.f32 %v360, %v367
    %v370 = vmul.f32 %v368, 1.442695
    %v371 = vpow.pop %v370
    %v372 = vmul.f32 %v369, 1.442695
    %v373 = vpow.pop %v372
    %v374 = vsel %vm152, %v371, 0.0
    %375 = vadd.xlane.f32.xlu0 %v374
    %v376 = vpop.xlane.xlu0 %375
    %v377 = vsel %vm152, %v373, 0.0
    %378 = vadd.xlane.f32.xlu0 %v377
    %v379 = vpop.xlane.xlu0 %378
    %v380 = vrcp.pop %v376
    %v381 = vmul.f32 %v376, %v380
    %v382 = vsub.f32 1.0, %v381
    %v383 = vmul.f32 %v380, %v382
    %v384 = vadd.f32 %v380, %v383
    %vm385 = vweird.f32 %v376
    %vm386 = vweird.f32 %v380
    %vm387 = vmor %vm385, %vm386
    %v388 = vsel %vm387, %v380, %v384
    %v389 = vand.u32 2147483647, %v376
    %vm390 = vcmp.eq.f32.partialorder %v389, 8.507059e+37
    %v391 = vand.u32 %v376, 2147483648
    %v392 = vor.u32 1.1754944e-38, %v391
    %v393 = vsel %vm390, %v392, %v388
    %v394 = vrcp.pop %v379
    %v395 = vmul.f32 %v379, %v394
    %v396 = vsub.f32 1.0, %v395
    %v397 = vmul.f32 %v394, %v396
    %v398 = vadd.f32 %v394, %v397
    %vm399 = vweird.f32 %v379
    %vm400 = vweird.f32 %v394
    %vm401 = vmor %vm399, %vm400
    %v402 = vsel %vm401, %v394, %v398
    %v403 = vand.u32 2147483647, %v379
    %vm404 = vcmp.eq.f32.partialorder %v403, 8.507059e+37
    %v405 = vand.u32 %v379, 2147483648
    %v406 = vor.u32 1.1754944e-38, %v405
    %v407 = vsel %vm404, %v406, %v402
    %v408 = vmul.f32 %v371, %v393
    %v409 = vmul.f32 %v373, %v407
    %410 = vrot.lane.b32.xlu0 %v146, 56
    %v411 = vpop.permute.xlu0 %410
    %v414 = vsel %vm152, %v408, 0
    %416 = vmatpush.msra.mxu0 0.0
    %417 = vmatpush.msra.mxu0 0.0
    %418 = vmatpush.msra.mxu0 0.0
    %419 = vmatpush.msra.mxu0 0.0
    %420 = vmatpush.msra.mxu0 0.0
    %421 = vmatpush.msra.mxu0 0.0
    %422 = vmatpush.msra.mxu0 0.0
    %423 = vmatpush.msra.mxu0 0.0
    %424 = vmatpush.msra.mxu0 0.0
    %425 = vmatpush.msra.mxu0 0.0
    %426 = vmatpush.msra.mxu0 0.0
    %427 = vmatpush.msra.mxu0 0.0
    %428 = vmatpush.msra.mxu0 0.0
    %429 = vmatpush.msra.mxu0 0.0
    %430 = vmatpush.msra.mxu0 0.0
    %431 = vmatpush.msra.mxu0 %v411
    %432 = vmatmul.f32.gmra.mxu0 %v414
    %v433 = vpop.f32.mrf.mxu0
    %v434 = vadd.f32 0.0, %v433
    %435 = vdwg.mxu0
    %436 = vrot.lane.b32.xlu0 %v147, 56
    %v437 = vpop.permute.xlu0 %436
    %v440 = vsel %vm152, %v409, 0
    %442 = vmatpush.msra.mxu0 0.0
    %443 = vmatpush.msra.mxu0 0.0
    %444 = vmatpush.msra.mxu0 0.0
    %445 = vmatpush.msra.mxu0 0.0
    %446 = vmatpush.msra.mxu0 0.0
    %447 = vmatpush.msra.mxu0 0.0
    %448 = vmatpush.msra.mxu0 0.0
    %449 = vmatpush.msra.mxu0 0.0
    %450 = vmatpush.msra.mxu0 0.0
    %451 = vmatpush.msra.mxu0 0.0
    %452 = vmatpush.msra.mxu0 0.0
    %453 = vmatpush.msra.mxu0 0.0
    %454 = vmatpush.msra.mxu0 0.0
    %455 = vmatpush.msra.mxu0 0.0
    %456 = vmatpush.msra.mxu0 0.0
    %457 = vmatpush.msra.mxu0 %v437
    %458 = vmatmul.f32.gmra.mxu0 %v440
    %v459 = vpop.f32.mrf.mxu0
    %v460 = vadd.f32 0.0, %v459
    %461 = vdwg.mxu0
    %462 = vrot.lane.b32.xlu0 %v138, 112
    %v463 = vpop.permute.xlu0 %462
    %464 = vrot.lane.b32.xlu0 %v138, 80
    %v465 = vpop.permute.xlu0 %464
    %v466 = vsel %vm152, %v463, 0
    %v468 = vsel %vm152, %v465, 0
    %470 = vmatpush.xpose.msra.mxu0 0.0
    %471 = vmatpush.xpose.msra.mxu0 0.0
    %472 = vmatpush.xpose.msra.mxu0 0.0
    %473 = vmatpush.xpose.msra.mxu0 0.0
    %474 = vmatpush.xpose.msra.mxu0 0.0
    %475 = vmatpush.xpose.msra.mxu0 0.0
    %476 = vmatpush.xpose.msra.mxu0 0.0
    %477 = vmatpush.xpose.msra.mxu0 0.0
    %478 = vmatpush.xpose.msra.mxu0 0.0
    %479 = vmatpush.xpose.msra.mxu0 0.0
    %480 = vmatpush.xpose.msra.mxu0 0.0
    %481 = vmatpush.xpose.msra.mxu0 0.0
    %482 = vmatpush.xpose.msra.mxu0 0.0
    %483 = vmatpush.xpose.msra.mxu0 0.0
    %484 = vmatpush.xpose.msra.mxu0 0.0
    %485 = vmatpush.xpose.msra.mxu0 %v468
    %486 = vmatmul.f32.gmra.mxu0 %v466
    %v487 = vpop.f32.mrf.mxu0
    %v488 = vadd.f32 %v30, %v487
    %489 = vdwg.mxu0
    %490 = vrot.lane.b32.xlu0 %v139, 112
    %v491 = vpop.permute.xlu0 %490
    %492 = vrot.lane.b32.xlu0 %v139, 80
    %v493 = vpop.permute.xlu0 %492
    %v494 = vsel %vm152, %v491, 0
    %v496 = vsel %vm152, %v493, 0
    %498 = vmatpush.xpose.msra.mxu0 0.0
    %499 = vmatpush.xpose.msra.mxu0 0.0
    %500 = vmatpush.xpose.msra.mxu0 0.0
    %501 = vmatpush.xpose.msra.mxu0 0.0
    %502 = vmatpush.xpose.msra.mxu0 0.0
    %503 = vmatpush.xpose.msra.mxu0 0.0
    %504 = vmatpush.xpose.msra.mxu0 0.0
    %505 = vmatpush.xpose.msra.mxu0 0.0
    %506 = vmatpush.xpose.msra.mxu0 0.0
    %507 = vmatpush.xpose.msra.mxu0 0.0
    %508 = vmatpush.xpose.msra.mxu0 0.0
    %509 = vmatpush.xpose.msra.mxu0 0.0
    %510 = vmatpush.xpose.msra.mxu0 0.0
    %511 = vmatpush.xpose.msra.mxu0 0.0
    %512 = vmatpush.xpose.msra.mxu0 0.0
    %513 = vmatpush.xpose.msra.mxu0 %v496
    %514 = vmatmul.f32.gmra.mxu0 %v494
    %v515 = vpop.f32.mrf.mxu0
    %v516 = vadd.f32 %v30, %v515
    %517 = vdwg.mxu0
    %v518 = vsel %vm152, %v488, -inf
    %519 = vmax.xlane.f32.xlu0 %v518
    %v520 = vpop.xlane.xlu0 %519
    %v521 = vsel %vm152, %v516, -inf
    %522 = vmax.xlane.f32.xlu0 %v521
    %v523 = vpop.xlane.xlu0 %522
    %v524 = vsub.f32 %v488, %v520
    %v525 = vsub.f32 %v516, %v523
    %v526 = vmul.f32 %v524, 1.442695
    %v527 = vpow.pop %v526
    %v528 = vmul.f32 %v525, 1.442695
    %v529 = vpow.pop %v528
    %v530 = vsel %vm152, %v527, 0.0
    %531 = vadd.xlane.f32.xlu0 %v530
    %v532 = vpop.xlane.xlu0 %531
    %v533 = vsel %vm152, %v529, 0.0
    %534 = vadd.xlane.f32.xlu0 %v533
    %v535 = vpop.xlane.xlu0 %534
    %v536 = vrcp.pop %v532
    %v537 = vmul.f32 %v532, %v536
    %v538 = vsub.f32 1.0, %v537
    %v539 = vmul.f32 %v536, %v538
    %v540 = vadd.f32 %v536, %v539
    %vm541 = vweird.f32 %v532
    %vm542 = vweird.f32 %v536
    %vm543 = vmor %vm541, %vm542
    %v544 = vsel %vm543, %v536, %v540
    %v545 = vand.u32 2147483647, %v532
    %vm546 = vcmp.eq.f32.partialorder %v545, 8.507059e+37
    %v547 = vand.u32 %v532, 2147483648
    %v548 = vor.u32 1.1754944e-38, %v547
    %v549 = vsel %vm546, %v548, %v544
    %v550 = vrcp.pop %v535
    %v551 = vmul.f32 %v535, %v550
    %v552 = vsub.f32 1.0, %v551
    %v553 = vmul.f32 %v550, %v552
    %v554 = vadd.f32 %v550, %v553
    %vm555 = vweird.f32 %v535
    %vm556 = vweird.f32 %v550
    %vm557 = vmor %vm555, %vm556
    %v558 = vsel %vm557, %v550, %v554
    %v559 = vand.u32 2147483647, %v535
    %vm560 = vcmp.eq.f32.partialorder %v559, 8.507059e+37
    %v561 = vand.u32 %v535, 2147483648
    %v562 = vor.u32 1.1754944e-38, %v561
    %v563 = vsel %vm560, %v562, %v558
    %v564 = vmul.f32 %v527, %v549
    %v565 = vmul.f32 %v529, %v563
    %566 = vrot.lane.b32.xlu0 %v146, 48
    %v567 = vpop.permute.xlu0 %566
    %v570 = vsel %vm152, %v564, 0
    %572 = vmatpush.msra.mxu0 0.0
    %573 = vmatpush.msra.mxu0 0.0
    %574 = vmatpush.msra.mxu0 0.0
    %575 = vmatpush.msra.mxu0 0.0
    %576 = vmatpush.msra.mxu0 0.0
    %577 = vmatpush.msra.mxu0 0.0
    %578 = vmatpush.msra.mxu0 0.0
    %579 = vmatpush.msra.mxu0 0.0
    %580 = vmatpush.msra.mxu0 0.0
    %581 = vmatpush.msra.mxu0 0.0
    %582 = vmatpush.msra.mxu0 0.0
    %583 = vmatpush.msra.mxu0 0.0
    %584 = vmatpush.msra.mxu0 0.0
    %585 = vmatpush.msra.mxu0 0.0
    %586 = vmatpush.msra.mxu0 0.0
    %587 = vmatpush.msra.mxu0 %v567
    %588 = vmatmul.f32.gmra.mxu0 %v570
    %v589 = vpop.f32.mrf.mxu0
    %v590 = vadd.f32 0.0, %v589
    %591 = vdwg.mxu0
    %592 = vrot.lane.b32.xlu0 %v147, 48
    %v593 = vpop.permute.xlu0 %592
    %v596 = vsel %vm152, %v565, 0
    %598 = vmatpush.msra.mxu0 0.0
    %599 = vmatpush.msra.mxu0 0.0
    %600 = vmatpush.msra.mxu0 0.0
    %601 = vmatpush.msra.mxu0 0.0
    %602 = vmatpush.msra.mxu0 0.0
    %603 = vmatpush.msra.mxu0 0.0
    %604 = vmatpush.msra.mxu0 0.0
    %605 = vmatpush.msra.mxu0 0.0
    %606 = vmatpush.msra.mxu0 0.0
    %607 = vmatpush.msra.mxu0 0.0
    %608 = vmatpush.msra.mxu0 0.0
    %609 = vmatpush.msra.mxu0 0.0
    %610 = vmatpush.msra.mxu0 0.0
    %611 = vmatpush.msra.mxu0 0.0
    %612 = vmatpush.msra.mxu0 0.0
    %613 = vmatpush.msra.mxu0 %v593
    %614 = vmatmul.f32.gmra.mxu0 %v596
    %v615 = vpop.f32.mrf.mxu0
    %v616 = vadd.f32 0.0, %v615
    %617 = vdwg.mxu0
    %618 = vrot.lane.b32.xlu0 %v138, 104
    %v619 = vpop.permute.xlu0 %618
    %620 = vrot.lane.b32.xlu0 %v138, 72
    %v621 = vpop.permute.xlu0 %620
    %v622 = vsel %vm152, %v619, 0
    %v624 = vsel %vm152, %v621, 0
    %626 = vmatpush.xpose.msra.mxu0 0.0
    %627 = vmatpush.xpose.msra.mxu0 0.0
    %628 = vmatpush.xpose.msra.mxu0 0.0
    %629 = vmatpush.xpose.msra.mxu0 0.0
    %630 = vmatpush.xpose.msra.mxu0 0.0
    %631 = vmatpush.xpose.msra.mxu0 0.0
    %632 = vmatpush.xpose.msra.mxu0 0.0
    %633 = vmatpush.xpose.msra.mxu0 0.0
    %634 = vmatpush.xpose.msra.mxu0 0.0
    %635 = vmatpush.xpose.msra.mxu0 0.0
    %636 = vmatpush.xpose.msra.mxu0 0.0
    %637 = vmatpush.xpose.msra.mxu0 0.0
    %638 = vmatpush.xpose.msra.mxu0 0.0
    %639 = vmatpush.xpose.msra.mxu0 0.0
    %640 = vmatpush.xpose.msra.mxu0 0.0
    %641 = vmatpush.xpose.msra.mxu0 %v624
    %642 = vmatmul.f32.gmra.mxu0 %v622
    %v643 = vpop.f32.mrf.mxu0
    %v644 = vadd.f32 %v30, %v643
    %645 = vdwg.mxu0
    %646 = vrot.lane.b32.xlu0 %v139, 104
    %v647 = vpop.permute.xlu0 %646
    %648 = vrot.lane.b32.xlu0 %v139, 72
    %v649 = vpop.permute.xlu0 %648
    %v650 = vsel %vm152, %v647, 0
    %v652 = vsel %vm152, %v649, 0
    %654 = vmatpush.xpose.msra.mxu0 0.0
    %655 = vmatpush.xpose.msra.mxu0 0.0
    %656 = vmatpush.xpose.msra.mxu0 0.0
    %657 = vmatpush.xpose.msra.mxu0 0.0
    %658 = vmatpush.xpose.msra.mxu0 0.0
    %659 = vmatpush.xpose.msra.mxu0 0.0
    %660 = vmatpush.xpose.msra.mxu0 0.0
    %661 = vmatpush.xpose.msra.mxu0 0.0
    %662 = vmatpush.xpose.msra.mxu0 0.0
    %663 = vmatpush.xpose.msra.mxu0 0.0
    %664 = vmatpush.xpose.msra.mxu0 0.0
    %665 = vmatpush.xpose.msra.mxu0 0.0
    %666 = vmatpush.xpose.msra.mxu0 0.0
    %667 = vmatpush.xpose.msra.mxu0 0.0
    %668 = vmatpush.xpose.msra.mxu0 0.0
    %669 = vmatpush.xpose.msra.mxu0 %v652
    %670 = vmatmul.f32.gmra.mxu0 %v650
    %v671 = vpop.f32.mrf.mxu0
    %v672 = vadd.f32 %v30, %v671
    %673 = vdwg.mxu0
    %v674 = vsel %vm152, %v644, -inf
    %675 = vmax.xlane.f32.xlu0 %v674
    %v676 = vpop.xlane.xlu0 %675
    %v677 = vsel %vm152, %v672, -inf
    %678 = vmax.xlane.f32.xlu0 %v677
    %v679 = vpop.xlane.xlu0 %678
    %v680 = vsub.f32 %v644, %v676
    %v681 = vsub.f32 %v672, %v679
    %v682 = vmul.f32 %v680, 1.442695
    %v683 = vpow.pop %v682
    %v684 = vmul.f32 %v681, 1.442695
    %v685 = vpow.pop %v684
    %v686 = vsel %vm152, %v683, 0.0
    %687 = vadd.xlane.f32.xlu0 %v686
    %v688 = vpop.xlane.xlu0 %687
    %v689 = vsel %vm152, %v685, 0.0
    %690 = vadd.xlane.f32.xlu0 %v689
    %v691 = vpop.xlane.xlu0 %690
    %v692 = vrcp.pop %v688
    %v693 = vmul.f32 %v688, %v692
    %v694 = vsub.f32 1.0, %v693
    %v695 = vmul.f32 %v692, %v694
    %v696 = vadd.f32 %v692, %v695
    %vm697 = vweird.f32 %v688
    %vm698 = vweird.f32 %v692
    %vm699 = vmor %vm697, %vm698
    %v700 = vsel %vm699, %v692, %v696
    %v701 = vand.u32 2147483647, %v688
    %vm702 = vcmp.eq.f32.partialorder %v701, 8.507059e+37
    %v703 = vand.u32 %v688, 2147483648
    %v704 = vor.u32 1.1754944e-38, %v703
    %v705 = vsel %vm702, %v704, %v700
    %v706 = vrcp.pop %v691
    %v707 = vmul.f32 %v691, %v706
    %v708 = vsub.f32 1.0, %v707
    %v709 = vmul.f32 %v706, %v708
    %v710 = vadd.f32 %v706, %v709
    %vm711 = vweird.f32 %v691
    %vm712 = vweird.f32 %v706
    %vm713 = vmor %vm711, %vm712
    %v714 = vsel %vm713, %v706, %v710
    %v715 = vand.u32 2147483647, %v691
    %vm716 = vcmp.eq.f32.partialorder %v715, 8.507059e+37
    %v717 = vand.u32 %v691, 2147483648
    %v718 = vor.u32 1.1754944e-38, %v717
    %v719 = vsel %vm716, %v718, %v714
    %v720 = vmul.f32 %v683, %v705
    %v721 = vmul.f32 %v685, %v719
    %722 = vrot.lane.b32.xlu0 %v146, 40
    %v723 = vpop.permute.xlu0 %722
    %v726 = vsel %vm152, %v720, 0
    %728 = vmatpush.msra.mxu0 0.0
    %729 = vmatpush.msra.mxu0 0.0
    %730 = vmatpush.msra.mxu0 0.0
    %731 = vmatpush.msra.mxu0 0.0
    %732 = vmatpush.msra.mxu0 0.0
    %733 = vmatpush.msra.mxu0 0.0
    %734 = vmatpush.msra.mxu0 0.0
    %735 = vmatpush.msra.mxu0 0.0
    %736 = vmatpush.msra.mxu0 0.0
    %737 = vmatpush.msra.mxu0 0.0
    %738 = vmatpush.msra.mxu0 0.0
    %739 = vmatpush.msra.mxu0 0.0
    %740 = vmatpush.msra.mxu0 0.0
    %741 = vmatpush.msra.mxu0 0.0
    %742 = vmatpush.msra.mxu0 0.0
    %743 = vmatpush.msra.mxu0 %v723
    %744 = vmatmul.f32.gmra.mxu0 %v726
    %v745 = vpop.f32.mrf.mxu0
    %v746 = vadd.f32 0.0, %v745
    %747 = vdwg.mxu0
    %748 = vrot.lane.b32.xlu0 %v147, 40
    %v749 = vpop.permute.xlu0 %748
    %v752 = vsel %vm152, %v721, 0
    %754 = vmatpush.msra.mxu0 0.0
    %755 = vmatpush.msra.mxu0 0.0
    %756 = vmatpush.msra.mxu0 0.0
    %757 = vmatpush.msra.mxu0 0.0
    %758 = vmatpush.msra.mxu0 0.0
    %759 = vmatpush.msra.mxu0 0.0
    %760 = vmatpush.msra.mxu0 0.0
    %761 = vmatpush.msra.mxu0 0.0
    %762 = vmatpush.msra.mxu0 0.0
    %763 = vmatpush.msra.mxu0 0.0
    %764 = vmatpush.msra.mxu0 0.0
    %765 = vmatpush.msra.mxu0 0.0
    %766 = vmatpush.msra.mxu0 0.0
    %767 = vmatpush.msra.mxu0 0.0
    %768 = vmatpush.msra.mxu0 0.0
    %769 = vmatpush.msra.mxu0 %v749
    %770 = vmatmul.f32.gmra.mxu0 %v752
    %v771 = vpop.f32.mrf.mxu0
    %v772 = vadd.f32 0.0, %v771
    %773 = vdwg.mxu0
    %776 = vrot.lane.b32.xlu0 %v434, 8
    %v777 = vpop.permute.xlu0 %776
    %778 = vrot.lane.b32.xlu0 %v460, 8
    %v779 = vpop.permute.xlu0 %778
    %784 = vrot.lane.b32.xlu0 %v590, 16
    %v785 = vpop.permute.xlu0 %784
    %786 = vrot.lane.b32.xlu0 %v616, 16
    %v787 = vpop.permute.xlu0 %786
    %792 = vrot.lane.b32.xlu0 %v746, 24
    %v793 = vpop.permute.xlu0 %792
    %794 = vrot.lane.b32.xlu0 %v772, 24
    %v795 = vpop.permute.xlu0 %794
    %v798 = vsel %vm152, %v277, %v777
    %v799 = vsel %vm152, %v304, %v779
    %vm800 = vcmask 130048
    %v801 = vsel %vm800, %v798, %v785
    %v802 = vsel %vm800, %v799, %v787
    %vm803 = vcmask 195584
    %v804 = vsel %vm803, %v801, %v793
    %v805 = vsel %vm803, %v802, %v795
    %v806 = vperm.slane %v148, 0
    %811 = vrot.lane.b32.xlu0 %v97, 32
    %v812 = vpop.permute.xlu0 %811
    %813 = vrot.lane.b32.xlu0 %v98, 32
    %v814 = vpop.permute.xlu0 %813
    %815 = vrot.lane.b32.xlu0 %v99, 32
    %v816 = vpop.permute.xlu0 %815
    %817 = vrot.lane.b32.xlu0 %v100, 32
    %v818 = vpop.permute.xlu0 %817
    %824 = vrot.lane.b32.xlu0 %v806, 96
    %v825 = vpop.permute.xlu0 %824
    %v828 = vsel %vm31, %v804, 0
    %v831 = vsel %vm31, %v805, 0
    %833 = vmatpush.msra.mxu0 0.0
    %834 = vmatpush.msra.mxu0 0.0
    %835 = vmatpush.msra.mxu0 0.0
    %836 = vmatpush.msra.mxu0 0.0
    %837 = vmatpush.msra.mxu0 0.0
    %838 = vmatpush.msra.mxu0 0.0
    %839 = vmatpush.msra.mxu0 0.0
    %840 = vmatpush.msra.mxu0 0.0
    %841 = vmatpush.msra.mxu0 0.0
    %842 = vmatpush.msra.mxu0 0.0
    %843 = vmatpush.msra.mxu0 0.0
    %844 = vmatpush.msra.mxu0 0.0
    %845 = vmatpush.msra.mxu0 %v818
    %846 = vmatpush.msra.mxu0 %v816
    %847 = vmatpush.msra.mxu0 %v814
    %848 = vmatpush.msra.mxu0 %v812
    %849 = vmatmul.f32.gmra.mxu0 %v828
    %v850 = vpop.f32.mrf.mxu0
    %v851 = vadd.f32 %v825, %v850
    %852 = vmatmul.f32.gmra.mxu0 %v831
    %v853 = vpop.f32.mrf.mxu0
    %v854 = vadd.f32 %v825, %v853
    %855 = vdwg.mxu0
    %v856 = vadd.f32 %v15, %v851
    %v857 = vadd.f32 %v16, %v854
    %v858 = vsel %vm31, %v856, 0.0
    %859 = vadd.xlane.f32.xlu0 %v858
    %v860 = vpop.xlane.xlu0 %859
    %v861 = vsel %vm31, %v857, 0.0
    %862 = vadd.xlane.f32.xlu0 %v861
    %v863 = vpop.xlane.xlu0 %862
    %v864 = vmul.f32 %v860, %v44
    %v865 = vmul.f32 %v863, %v44
    %v866 = vsub.f32 %v856, %v864
    %v867 = vsub.f32 %v857, %v865
    %v868 = vmul.f32 %v866, %v866
    %v869 = vmul.f32 %v867, %v867
    %v870 = vsel %vm31, %v868, 0.0
    %871 = vadd.xlane.f32.xlu0 %v870
    %v872 = vpop.xlane.xlu0 %871
    %v873 = vsel %vm31, %v869, 0.0
    %874 = vadd.xlane.f32.xlu0 %v873
    %v875 = vpop.xlane.xlu0 %874
    %v876 = vmul.f32 %v872, %v44
    %v877 = vmul.f32 %v875, %v44
    %v878 = vadd.f32 %v876, 1e-05
    %v879 = vadd.f32 %v877, 1e-05
    %v880 = vrsqrt.pop %v878
    %v881 = vmul.f32 %v880, %v878
    %v882 = vmul.f32 %v881, %v880
    %v883 = vmul.f32 0.5, %v882
    %v884 = vsub.f32 1.5, %v883
    %v885 = vmul.f32 %v880, %v884
    %vm886 = vweird.f32 %v878
    %vm887 = vweird.f32 %v880
    %vm888 = vmor %vm886, %vm887
    %v889 = vsel %vm888, %v880, %v885
    %v890 = vrsqrt.pop %v879
    %v891 = vmul.f32 %v890, %v879
    %v892 = vmul.f32 %v891, %v890
    %v893 = vmul.f32 0.5, %v892
    %v894 = vsub.f32 1.5, %v893
    %v895 = vmul.f32 %v890, %v894
    %vm896 = vweird.f32 %v879
    %vm897 = vweird.f32 %v890
    %vm898 = vmor %vm896, %vm897
    %v899 = vsel %vm898, %v890, %v895
    %v900 = vmul.f32 %v866, %v889
    %v901 = vmul.f32 %v867, %v899
    %v902 = vperm.slane %v21, 0
    %904 = vrot.lane.b32.xlu0 %v902, 96
    %v905 = vpop.permute.xlu0 %904
    %v907 = vmul.f32 %v900, %v905
    %v908 = vmul.f32 %v901, %v905
    %v909 = vperm.slane %v22, 0
    %911 = vrot.lane.b32.xlu0 %v909, 96
    %v912 = vpop.permute.xlu0 %911
    %v914 = vadd.f32 %v907, %v912
    %v915 = vadd.f32 %v908, %v912
    %v916 = vld [vmem:[%s1 + $0x10] sm:$0xff]
    %v917 = vld [vmem:[%s1 + $0x28] sm:$0xff]
    %v918 = vld [vmem:[%s1 + $0x40] sm:$0xff]
    %v919 = vld [vmem:[%s1 + $0x58] sm:$0xff]
    %v921 = vsel %vm31, %v914, 0
    %v924 = vsel %vm31, %v915, 0
    %926 = vmatpush.msra.mxu0 0.0
    %927 = vmatpush.msra.mxu0 0.0
    %928 = vmatpush.msra.mxu0 0.0
    %929 = vmatpush.msra.mxu0 0.0
    %930 = vmatpush.msra.mxu0 0.0
    %931 = vmatpush.msra.mxu0 0.0
    %932 = vmatpush.msra.mxu0 0.0
    %933 = vmatpush.msra.mxu0 0.0
    %934 = vmatpush.msra.mxu0 0.0
    %935 = vmatpush.msra.mxu0 0.0
    %936 = vmatpush.msra.mxu0 0.0
    %937 = vmatpush.msra.mxu0 0.0
    %938 = vmatpush.msra.mxu0 %v919
    %939 = vmatpush.msra.mxu0 %v918
    %940 = vmatpush.msra.mxu0 %v917
    %941 = vmatpush.msra.mxu0 %v916
    %942 = vmatmul.f32.gmra.mxu0 %v921
    %v943 = vpop.f32.mrf.mxu0
    %v944 = vadd.f32 %v17, %v943
    %945 = vmatmul.f32.gmra.mxu0 %v924
    %v946 = vpop.f32.mrf.mxu0
    %v947 = vadd.f32 %v18, %v946
    %948 = vdwg.mxu0
    %v949 = vld [vmem:[%s1 + $0x8] sm:$0xff]
    %v950 = vld [vmem:[%s1 + $0x20] sm:$0xff]
    %v951 = vld [vmem:[%s1 + $0x38] sm:$0xff]
    %v952 = vld [vmem:[%s1 + $0x50] sm:$0xff]
    %953 = vrot.lane.b32.xlu0 %v15, 96
    %v954 = vpop.permute.xlu0 %953
    %955 = vrot.lane.b32.xlu0 %v16, 96
    %v956 = vpop.permute.xlu0 %955
    %v957 = vsel %vm31, %v954, 0
    %v959 = vsel %vm31, %v956, 0
    %961 = vmatpush.msra.mxu0 0.0
    %962 = vmatpush.msra.mxu0 0.0
    %963 = vmatpush.msra.mxu0 0.0
    %964 = vmatpush.msra.mxu0 0.0
    %965 = vmatpush.msra.mxu0 0.0
    %966 = vmatpush.msra.mxu0 0.0
    %967 = vmatpush.msra.mxu0 0.0
    %968 = vmatpush.msra.mxu0 0.0
    %969 = vmatpush.msra.mxu0 0.0
    %970 = vmatpush.msra.mxu0 0.0
    %971 = vmatpush.msra.mxu0 0.0
    %972 = vmatpush.msra.mxu0 0.0
    %973 = vmatpush.msra.mxu0 %v952
    %974 = vmatpush.msra.mxu0 %v951
    %975 = vmatpush.msra.mxu0 %v950
    %976 = vmatpush.msra.mxu0 %v949
    %977 = vmatmul.f32.gmra.mxu0 %v957
    %v978 = vpop.f32.mrf.mxu0
    %v979 = vadd.f32 0.0, %v978
    %980 = vmatmul.f32.gmra.mxu0 %v959
    %v981 = vpop.f32.mrf.mxu0
    %v982 = vadd.f32 0.0, %v981
    %983 = vdwg.mxu0
    %986 = vrot.lane.b32.xlu0 %v17, 96
    %v987 = vpop.permute.xlu0 %986
    %988 = vrot.lane.b32.xlu0 %v18, 96
    %v989 = vpop.permute.xlu0 %988
    %v992 = vadd.f32 %v979, %v987
    %v993 = vadd.f32 %v982, %v989
    %v994 = vld [vmem:[%s2 + $0x2] sm:$0x1]
    %v995 = vperm.slane %v994, 0
    %v996 = vadd.f32 %v979, %v995
    %v997 = vadd.f32 %v982, %v995
    %v998 = vld [vmem:[%s2 + $0x3] sm:$0x1]
    %v1000 = vsel %vm152, %v944, 0
    %v1003 = vsel %vm152, %v992, 0
    %1005 = vmatpush.xpose.msra.mxu0 0.0
    %1006 = vmatpush.xpose.msra.mxu0 0.0
    %1007 = vmatpush.xpose.msra.mxu0 0.0
    %1008 = vmatpush.xpose.msra.mxu0 0.0
    %1009 = vmatpush.xpose.msra.mxu0 0.0
    %1010 = vmatpush.xpose.msra.mxu0 0.0
    %1011 = vmatpush.xpose.msra.mxu0 0.0
    %1012 = vmatpush.xpose.msra.mxu0 0.0
    %1013 = vmatpush.xpose.msra.mxu0 0.0
    %1014 = vmatpush.xpose.msra.mxu0 0.0
    %1015 = vmatpush.xpose.msra.mxu0 0.0
    %1016 = vmatpush.xpose.msra.mxu0 0.0
    %1017 = vmatpush.xpose.msra.mxu0 0.0
    %1018 = vmatpush.xpose.msra.mxu0 0.0
    %1019 = vmatpush.xpose.msra.mxu0 0.0
    %1020 = vmatpush.xpose.msra.mxu0 %v1003
    %1021 = vmatmul.f32.gmra.mxu0 %v1000
    %v1022 = vpop.f32.mrf.mxu0
    %v1023 = vadd.f32 %v30, %v1022
    %1024 = vdwg.mxu0
    %v1026 = vsel %vm152, %v947, 0
    %v1029 = vsel %vm152, %v993, 0
    %1031 = vmatpush.xpose.msra.mxu0 0.0
    %1032 = vmatpush.xpose.msra.mxu0 0.0
    %1033 = vmatpush.xpose.msra.mxu0 0.0
    %1034 = vmatpush.xpose.msra.mxu0 0.0
    %1035 = vmatpush.xpose.msra.mxu0 0.0
    %1036 = vmatpush.xpose.msra.mxu0 0.0
    %1037 = vmatpush.xpose.msra.mxu0 0.0
    %1038 = vmatpush.xpose.msra.mxu0 0.0
    %1039 = vmatpush.xpose.msra.mxu0 0.0
    %1040 = vmatpush.xpose.msra.mxu0 0.0
    %1041 = vmatpush.xpose.msra.mxu0 0.0
    %1042 = vmatpush.xpose.msra.mxu0 0.0
    %1043 = vmatpush.xpose.msra.mxu0 0.0
    %1044 = vmatpush.xpose.msra.mxu0 0.0
    %1045 = vmatpush.xpose.msra.mxu0 0.0
    %1046 = vmatpush.xpose.msra.mxu0 %v1029
    %1047 = vmatmul.f32.gmra.mxu0 %v1026
    %v1048 = vpop.f32.mrf.mxu0
    %v1049 = vadd.f32 %v30, %v1048
    %1050 = vdwg.mxu0
    %v1051 = vsel %vm152, %v1023, -inf
    %1052 = vmax.xlane.f32.xlu0 %v1051
    %v1053 = vpop.xlane.xlu0 %1052
    %v1054 = vsel %vm152, %v1049, -inf
    %1055 = vmax.xlane.f32.xlu0 %v1054
    %v1056 = vpop.xlane.xlu0 %1055
    %v1057 = vsub.f32 %v1023, %v1053
    %v1058 = vsub.f32 %v1049, %v1056
    %v1059 = vmul.f32 %v1057, 1.442695
    %v1060 = vpow.pop %v1059
    %v1061 = vmul.f32 %v1058, 1.442695
    %v1062 = vpow.pop %v1061
    %v1063 = vsel %vm152, %v1060, 0.0
    %1064 = vadd.xlane.f32.xlu0 %v1063
    %v1065 = vpop.xlane.xlu0 %1064
    %v1066 = vsel %vm152, %v1062, 0.0
    %1067 = vadd.xlane.f32.xlu0 %v1066
    %v1068 = vpop.xlane.xlu0 %1067
    %v1069 = vrcp.pop %v1065
    %v1070 = vmul.f32 %v1065, %v1069
    %v1071 = vsub.f32 1.0, %v1070
    %v1072 = vmul.f32 %v1069, %v1071
    %v1073 = vadd.f32 %v1069, %v1072
    %vm1074 = vweird.f32 %v1065
    %vm1075 = vweird.f32 %v1069
    %vm1076 = vmor %vm1074, %vm1075
    %v1077 = vsel %vm1076, %v1069, %v1073
    %v1078 = vand.u32 2147483647, %v1065
    %vm1079 = vcmp.eq.f32.partialorder %v1078, 8.507059e+37
    %v1080 = vand.u32 %v1065, 2147483648
    %v1081 = vor.u32 1.1754944e-38, %v1080
    %v1082 = vsel %vm1079, %v1081, %v1077
    %v1083 = vrcp.pop %v1068
    %v1084 = vmul.f32 %v1068, %v1083
    %v1085 = vsub.f32 1.0, %v1084
    %v1086 = vmul.f32 %v1083, %v1085
    %v1087 = vadd.f32 %v1083, %v1086
    %vm1088 = vweird.f32 %v1068
    %vm1089 = vweird.f32 %v1083
    %vm1090 = vmor %vm1088, %vm1089
    %v1091 = vsel %vm1090, %v1083, %v1087
    %v1092 = vand.u32 2147483647, %v1068
    %vm1093 = vcmp.eq.f32.partialorder %v1092, 8.507059e+37
    %v1094 = vand.u32 %v1068, 2147483648
    %v1095 = vor.u32 1.1754944e-38, %v1094
    %v1096 = vsel %vm1093, %v1095, %v1091
    %v1097 = vmul.f32 %v1060, %v1082
    %v1098 = vmul.f32 %v1062, %v1096
    %1100 = vrot.lane.b32.xlu0 %v996, 96
    %v1101 = vpop.permute.xlu0 %1100
    %v1104 = vsel %vm152, %v1097, 0
    %1106 = vmatpush.msra.mxu0 0.0
    %1107 = vmatpush.msra.mxu0 0.0
    %1108 = vmatpush.msra.mxu0 0.0
    %1109 = vmatpush.msra.mxu0 0.0
    %1110 = vmatpush.msra.mxu0 0.0
    %1111 = vmatpush.msra.mxu0 0.0
    %1112 = vmatpush.msra.mxu0 0.0
    %1113 = vmatpush.msra.mxu0 0.0
    %1114 = vmatpush.msra.mxu0 0.0
    %1115 = vmatpush.msra.mxu0 0.0
    %1116 = vmatpush.msra.mxu0 0.0
    %1117 = vmatpush.msra.mxu0 0.0
    %1118 = vmatpush.msra.mxu0 0.0
    %1119 = vmatpush.msra.mxu0 0.0
    %1120 = vmatpush.msra.mxu0 0.0
    %1121 = vmatpush.msra.mxu0 %v1101
    %1122 = vmatmul.f32.gmra.mxu0 %v1104
    %v1123 = vpop.f32.mrf.mxu0
    %v1124 = vadd.f32 0.0, %v1123
    %1125 = vdwg.mxu0
    %1127 = vrot.lane.b32.xlu0 %v997, 96
    %v1128 = vpop.permute.xlu0 %1127
    %v1131 = vsel %vm152, %v1098, 0
    %1133 = vmatpush.msra.mxu0 0.0
    %1134 = vmatpush.msra.mxu0 0.0
    %1135 = vmatpush.msra.mxu0 0.0
    %1136 = vmatpush.msra.mxu0 0.0
    %1137 = vmatpush.msra.mxu0 0.0
    %1138 = vmatpush.msra.mxu0 0.0
    %1139 = vmatpush.msra.mxu0 0.0
    %1140 = vmatpush.msra.mxu0 0.0
    %1141 = vmatpush.msra.mxu0 0.0
    %1142 = vmatpush.msra.mxu0 0.0
    %1143 = vmatpush.msra.mxu0 0.0
    %1144 = vmatpush.msra.mxu0 0.0
    %1145 = vmatpush.msra.mxu0 0.0
    %1146 = vmatpush.msra.mxu0 0.0
    %1147 = vmatpush.msra.mxu0 0.0
    %1148 = vmatpush.msra.mxu0 %v1128
    %1149 = vmatmul.f32.gmra.mxu0 %v1131
    %v1150 = vpop.f32.mrf.mxu0
    %v1151 = vadd.f32 0.0, %v1150
    %1152 = vdwg.mxu0
    %1153 = vrot.lane.b32.xlu0 %v944, 120
    %v1154 = vpop.permute.xlu0 %1153
    %1155 = vrot.lane.b32.xlu0 %v992, 120
    %v1156 = vpop.permute.xlu0 %1155
    %v1157 = vsel %vm152, %v1154, 0
    %v1159 = vsel %vm152, %v1156, 0
    %1161 = vmatpush.xpose.msra.mxu0 0.0
    %1162 = vmatpush.xpose.msra.mxu0 0.0
    %1163 = vmatpush.xpose.msra.mxu0 0.0
    %1164 = vmatpush.xpose.msra.mxu0 0.0
    %1165 = vmatpush.xpose.msra.mxu0 0.0
    %1166 = vmatpush.xpose.msra.mxu0 0.0
    %1167 = vmatpush.xpose.msra.mxu0 0.0
    %1168 = vmatpush.xpose.msra.mxu0 0.0
    %1169 = vmatpush.xpose.msra.mxu0 0.0
    %1170 = vmatpush.xpose.msra.mxu0 0.0
    %1171 = vmatpush.xpose.msra.mxu0 0.0
    %1172 = vmatpush.xpose.msra.mxu0 0.0
    %1173 = vmatpush.xpose.msra.mxu0 0.0
    %1174 = vmatpush.xpose.msra.mxu0 0.0
    %1175 = vmatpush.xpose.msra.mxu0 0.0
    %1176 = vmatpush.xpose.msra.mxu0 %v1159
    %1177 = vmatmul.f32.gmra.mxu0 %v1157
    %v1178 = vpop.f32.mrf.mxu0
    %v1179 = vadd.f32 %v30, %v1178
    %1180 = vdwg.mxu0
    %1181 = vrot.lane.b32.xlu0 %v947, 120
    %v1182 = vpop.permute.xlu0 %1181
    %1183 = vrot.lane.b32.xlu0 %v993, 120
    %v1184 = vpop.permute.xlu0 %1183
    %v1185 = vsel %vm152, %v1182, 0
    %v1187 = vsel %vm152, %v1184, 0
    %1189 = vmatpush.xpose.msra.mxu0 0.0
    %1190 = vmatpush.xpose.msra.mxu0 0.0
    %1191 = vmatpush.xpose.msra.mxu0 0.0
    %1192 = vmatpush.xpose.msra.mxu0 0.0
    %1193 = vmatpush.xpose.msra.mxu0 0.0
    %1194 = vmatpush.xpose.msra.mxu0 0.0
    %1195 = vmatpush.xpose.msra.mxu0 0.0
    %1196 = vmatpush.xpose.msra.mxu0 0.0
    %1197 = vmatpush.xpose.msra.mxu0 0.0
    %1198 = vmatpush.xpose.msra.mxu0 0.0
    %1199 = vmatpush.xpose.msra.mxu0 0.0
    %1200 = vmatpush.xpose.msra.mxu0 0.0
    %1201 = vmatpush.xpose.msra.mxu0 0.0
    %1202 = vmatpush.xpose.msra.mxu0 0.0
    %1203 = vmatpush.xpose.msra.mxu0 0.0
    %1204 = vmatpush.xpose.msra.mxu0 %v1187
    %1205 = vmatmul.f32.gmra.mxu0 %v1185
    %v1206 = vpop.f32.mrf.mxu0
    %v1207 = vadd.f32 %v30, %v1206
    %1208 = vdwg.mxu0
    %v1209 = vsel %vm152, %v1179, -inf
    %1210 = vmax.xlane.f32.xlu0 %v1209
    %v1211 = vpop.xlane.xlu0 %1210
    %v1212 = vsel %vm152, %v1207, -inf
    %1213 = vmax.xlane.f32.xlu0 %v1212
    %v1214 = vpop.xlane.xlu0 %1213
    %v1215 = vsub.f32 %v1179, %v1211
    %v1216 = vsub.f32 %v1207, %v1214
    %v1217 = vmul.f32 %v1215, 1.442695
    %v1218 = vpow.pop %v1217
    %v1219 = vmul.f32 %v1216, 1.442695
    %v1220 = vpow.pop %v1219
    %v1221 = vsel %vm152, %v1218, 0.0
    %1222 = vadd.xlane.f32.xlu0 %v1221
    %v1223 = vpop.xlane.xlu0 %1222
    %v1224 = vsel %vm152, %v1220, 0.0
    %1225 = vadd.xlane.f32.xlu0 %v1224
    %v1226 = vpop.xlane.xlu0 %1225
    %v1227 = vrcp.pop %v1223
    %v1228 = vmul.f32 %v1223, %v1227
    %v1229 = vsub.f32 1.0, %v1228
    %v1230 = vmul.f32 %v1227, %v1229
    %v1231 = vadd.f32 %v1227, %v1230
    %vm1232 = vweird.f32 %v1223
    %vm1233 = vweird.f32 %v1227
    %vm1234 = vmor %vm1232, %vm1233
    %v1235 = vsel %vm1234, %v1227, %v1231
    %v1236 = vand.u32 2147483647, %v1223
    %vm1237 = vcmp.eq.f32.partialorder %v1236, 8.507059e+37
    %v1238 = vand.u32 %v1223, 2147483648
    %v1239 = vor.u32 1.1754944e-38, %v1238
    %v1240 = vsel %vm1237, %v1239, %v1235
    %v1241 = vrcp.pop %v1226
    %v1242 = vmul.f32 %v1226, %v1241
    %v1243 = vsub.f32 1.0, %v1242
    %v1244 = vmul.f32 %v1241, %v1243
    %v1245 = vadd.f32 %v1241, %v1244
    %vm1246 = vweird.f32 %v1226
    %vm1247 = vweird.f32 %v1241
    %vm1248 = vmor %vm1246, %vm1247
    %v1249 = vsel %vm1248, %v1241, %v1245
    %v1250 = vand.u32 2147483647, %v1226
    %vm1251 = vcmp.eq.f32.partialorder %v1250, 8.507059e+37
    %v1252 = vand.u32 %v1226, 2147483648
    %v1253 = vor.u32 1.1754944e-38, %v1252
    %v1254 = vsel %vm1251, %v1253, %v1249
    %v1255 = vmul.f32 %v1218, %v1240
    %v1256 = vmul.f32 %v1220, %v1254
    %1257 = vrot.lane.b32.xlu0 %v996, 88
    %v1258 = vpop.permute.xlu0 %1257
    %v1261 = vsel %vm152, %v1255, 0
    %1263 = vmatpush.msra.mxu0 0.0
    %1264 = vmatpush.msra.mxu0 0.0
    %1265 = vmatpush.msra.mxu0 0.0
    %1266 = vmatpush.msra.mxu0 0.0
    %1267 = vmatpush.msra.mxu0 0.0
    %1268 = vmatpush.msra.mxu0 0.0
    %1269 = vmatpush.msra.mxu0 0.0
    %1270 = vmatpush.msra.mxu0 0.0
    %1271 = vmatpush.msra.mxu0 0.0
    %1272 = vmatpush.msra.mxu0 0.0
    %1273 = vmatpush.msra.mxu0 0.0
    %1274 = vmatpush.msra.mxu0 0.0
    %1275 = vmatpush.msra.mxu0 0.0
    %1276 = vmatpush.msra.mxu0 0.0
    %1277 = vmatpush.msra.mxu0 0.0
    %1278 = vmatpush.msra.mxu0 %v1258
    %1279 = vmatmul.f32.gmra.mxu0 %v1261
    %v1280 = vpop.f32.mrf.mxu0
    %v1281 = vadd.f32 0.0, %v1280
    %1282 = vdwg.mxu0
    %1283 = vrot.lane.b32.xlu0 %v997, 88
    %v1284 = vpop.permute.xlu0 %1283
    %v1287 = vsel %vm152, %v1256, 0
    %1289 = vmatpush.msra.mxu0 0.0
    %1290 = vmatpush.msra.mxu0 0.0
    %1291 = vmatpush.msra.mxu0 0.0
    %1292 = vmatpush.msra.mxu0 0.0
    %1293 = vmatpush.msra.mxu0 0.0
    %1294 = vmatpush.msra.mxu0 0.0
    %1295 = vmatpush.msra.mxu0 0.0
    %1296 = vmatpush.msra.mxu0 0.0
    %1297 = vmatpush.msra.mxu0 0.0
    %1298 = vmatpush.msra.mxu0 0.0
    %1299 = vmatpush.msra.mxu0 0.0
    %1300 = vmatpush.msra.mxu0 0.0
    %1301 = vmatpush.msra.mxu0 0.0
    %1302 = vmatpush.msra.mxu0 0.0
    %1303 = vmatpush.msra.mxu0 0.0
    %1304 = vmatpush.msra.mxu0 %v1284
    %1305 = vmatmul.f32.gmra.mxu0 %v1287
    %v1306 = vpop.f32.mrf.mxu0
    %v1307 = vadd.f32 0.0, %v1306
    %1308 = vdwg.mxu0
    %1309 = vrot.lane.b32.xlu0 %v944, 112
    %v1310 = vpop.permute.xlu0 %1309
    %1311 = vrot.lane.b32.xlu0 %v992, 112
    %v1312 = vpop.permute.xlu0 %1311
    %v1313 = vsel %vm152, %v1310, 0
    %v1315 = vsel %vm152, %v1312, 0
    %1317 = vmatpush.xpose.msra.mxu0 0.0
    %1318 = vmatpush.xpose.msra.mxu0 0.0
    %1319 = vmatpush.xpose.msra.mxu0 0.0
    %1320 = vmatpush.xpose.msra.mxu0 0.0
    %1321 = vmatpush.xpose.msra.mxu0 0.0
    %1322 = vmatpush.xpose.msra.mxu0 0.0
    %1323 = vmatpush.xpose.msra.mxu0 0.0
    %1324 = vmatpush.xpose.msra.mxu0 0.0
    %1325 = vmatpush.xpose.msra.mxu0 0.0
    %1326 = vmatpush.xpose.msra.mxu0 0.0
    %1327 = vmatpush.xpose.msra.mxu0 0.0
    %1328 = vmatpush.xpose.msra.mxu0 0.0
    %1329 = vmatpush.xpose.msra.mxu0 0.0
    %1330 = vmatpush.xpose.msra.mxu0 0.0
    %1331 = vmatpush.xpose.msra.mxu0 0.0
    %1332 = vmatpush.xpose.msra.mxu0 %v1315
    %1333 = vmatmul.f32.gmra.mxu0 %v1313
    %v1334 = vpop.f32.mrf.mxu0
    %v1335 = vadd.f32 %v30, %v1334
    %1336 = vdwg.mxu0
    %1337 = vrot.lane.b32.xlu0 %v947, 112
    %v1338 = vpop.permute.xlu0 %1337
    %1339 = vrot.lane.b32.xlu0 %v993, 112
    %v1340 = vpop.permute.xlu0 %1339
    %v1341 = vsel %vm152, %v1338, 0
    %v1343 = vsel %vm152, %v1340, 0
    %1345 = vmatpush.xpose.msra.mxu0 0.0
    %1346 = vmatpush.xpose.msra.mxu0 0.0
    %1347 = vmatpush.xpose.msra.mxu0 0.0
    %1348 = vmatpush.xpose.msra.mxu0 0.0
    %1349 = vmatpush.xpose.msra.mxu0 0.0
    %1350 = vmatpush.xpose.msra.mxu0 0.0
    %1351 = vmatpush.xpose.msra.mxu0 0.0
    %1352 = vmatpush.xpose.msra.mxu0 0.0
    %1353 = vmatpush.xpose.msra.mxu0 0.0
    %1354 = vmatpush.xpose.msra.mxu0 0.0
    %1355 = vmatpush.xpose.msra.mxu0 0.0
    %1356 = vmatpush.xpose.msra.mxu0 0.0
    %1357 = vmatpush.xpose.msra.mxu0 0.0
    %1358 = vmatpush.xpose.msra.mxu0 0.0
    %1359 = vmatpush.xpose.msra.mxu0 0.0
    %1360 = vmatpush.xpose.msra.mxu0 %v1343
    %1361 = vmatmul.f32.gmra.mxu0 %v1341
    %v1362 = vpop.f32.mrf.mxu0
    %v1363 = vadd.f32 %v30, %v1362
    %1364 = vdwg.mxu0
    %v1365 = vsel %vm152, %v1335, -inf
    %1366 = vmax.xlane.f32.xlu0 %v1365
    %v1367 = vpop.xlane.xlu0 %1366
    %v1368 = vsel %vm152, %v1363, -inf
    %1369 = vmax.xlane.f32.xlu0 %v1368
    %v1370 = vpop.xlane.xlu0 %1369
    %v1371 = vsub.f32 %v1335, %v1367
    %v1372 = vsub.f32 %v1363, %v1370
    %v1373 = vmul.f32 %v1371, 1.442695
    %v1374 = vpow.pop %v1373
    %v1375 = vmul.f32 %v1372, 1.442695
    %v1376 = vpow.pop %v1375
    %v1377 = vsel %vm152, %v1374, 0.0
    %1378 = vadd.xlane.f32.xlu0 %v1377
    %v1379 = vpop.xlane.xlu0 %1378
    %v1380 = vsel %vm152, %v1376, 0.0
    %1381 = vadd.xlane.f32.xlu0 %v1380
    %v1382 = vpop.xlane.xlu0 %1381
    %v1383 = vrcp.pop %v1379
    %v1384 = vmul.f32 %v1379, %v1383
    %v1385 = vsub.f32 1.0, %v1384
    %v1386 = vmul.f32 %v1383, %v1385
    %v1387 = vadd.f32 %v1383, %v1386
    %vm1388 = vweird.f32 %v1379
    %vm1389 = vweird.f32 %v1383
    %vm1390 = vmor %vm1388, %vm1389
    %v1391 = vsel %vm1390, %v1383, %v1387
    %v1392 = vand.u32 2147483647, %v1379
    %vm1393 = vcmp.eq.f32.partialorder %v1392, 8.507059e+37
    %v1394 = vand.u32 %v1379, 2147483648
    %v1395 = vor.u32 1.1754944e-38, %v1394
    %v1396 = vsel %vm1393, %v1395, %v1391
    %v1397 = vrcp.pop %v1382
    %v1398 = vmul.f32 %v1382, %v1397
    %v1399 = vsub.f32 1.0, %v1398
    %v1400 = vmul.f32 %v1397, %v1399
    %v1401 = vadd.f32 %v1397, %v1400
    %vm1402 = vweird.f32 %v1382
    %vm1403 = vweird.f32 %v1397
    %vm1404 = vmor %vm1402, %vm1403
    %v1405 = vsel %vm1404, %v1397, %v1401
    %v1406 = vand.u32 2147483647, %v1382
    %vm1407 = vcmp.eq.f32.partialorder %v1406, 8.507059e+37
    %v1408 = vand.u32 %v1382, 2147483648
    %v1409 = vor.u32 1.1754944e-38, %v1408
    %v1410 = vsel %vm1407, %v1409, %v1405
    %v1411 = vmul.f32 %v1374, %v1396
    %v1412 = vmul.f32 %v1376, %v1410
    %1413 = vrot.lane.b32.xlu0 %v996, 80
    %v1414 = vpop.permute.xlu0 %1413
    %v1417 = vsel %vm152, %v1411, 0
    %1419 = vmatpush.msra.mxu0 0.0
    %1420 = vmatpush.msra.mxu0 0.0
    %1421 = vmatpush.msra.mxu0 0.0
    %1422 = vmatpush.msra.mxu0 0.0
    %1423 = vmatpush.msra.mxu0 0.0
    %1424 = vmatpush.msra.mxu0 0.0
    %1425 = vmatpush.msra.mxu0 0.0
    %1426 = vmatpush.msra.mxu0 0.0
    %1427 = vmatpush.msra.mxu0 0.0
    %1428 = vmatpush.msra.mxu0 0.0
    %1429 = vmatpush.msra.mxu0 0.0
    %1430 = vmatpush.msra.mxu0 0.0
    %1431 = vmatpush.msra.mxu0 0.0
    %1432 = vmatpush.msra.mxu0 0.0
    %1433 = vmatpush.msra.mxu0 0.0
    %1434 = vmatpush.msra.mxu0 %v1414
    %1435 = vmatmul.f32.gmra.mxu0 %v1417
    %v1436 = vpop.f32.mrf.mxu0
    %v1437 = vadd.f32 0.0, %v1436
    %1438 = vdwg.mxu0
    %1439 = vrot.lane.b32.xlu0 %v997, 80
    %v1440 = vpop.permute.xlu0 %1439
    %v1443 = vsel %vm152, %v1412, 0
    %1445 = vmatpush.msra.mxu0 0.0
    %1446 = vmatpush.msra.mxu0 0.0
    %1447 = vmatpush.msra.mxu0 0.0
    %1448 = vmatpush.msra.mxu0 0.0
    %1449 = vmatpush.msra.mxu0 0.0
    %1450 = vmatpush.msra.mxu0 0.0
    %1451 = vmatpush.msra.mxu0 0.0
    %1452 = vmatpush.msra.mxu0 0.0
    %1453 = vmatpush.msra.mxu0 0.0
    %1454 = vmatpush.msra.mxu0 0.0
    %1455 = vmatpush.msra.mxu0 0.0
    %1456 = vmatpush.msra.mxu0 0.0
    %1457 = vmatpush.msra.mxu0 0.0
    %1458 = vmatpush.msra.mxu0 0.0
    %1459 = vmatpush.msra.mxu0 0.0
    %1460 = vmatpush.msra.mxu0 %v1440
    %1461 = vmatmul.f32.gmra.mxu0 %v1443
    %v1462 = vpop.f32.mrf.mxu0
    %v1463 = vadd.f32 0.0, %v1462
    %1464 = vdwg.mxu0
    %1465 = vrot.lane.b32.xlu0 %v944, 104
    %v1466 = vpop.permute.xlu0 %1465
    %1467 = vrot.lane.b32.xlu0 %v992, 104
    %v1468 = vpop.permute.xlu0 %1467
    %v1469 = vsel %vm152, %v1466, 0
    %v1471 = vsel %vm152, %v1468, 0
    %1473 = vmatpush.xpose.msra.mxu0 0.0
    %1474 = vmatpush.xpose.msra.mxu0 0.0
    %1475 = vmatpush.xpose.msra.mxu0 0.0
    %1476 = vmatpush.xpose.msra.mxu0 0.0
    %1477 = vmatpush.xpose.msra.mxu0 0.0
    %1478 = vmatpush.xpose.msra.mxu0 0.0
    %1479 = vmatpush.xpose.msra.mxu0 0.0
    %1480 = vmatpush.xpose.msra.mxu0 0.0
    %1481 = vmatpush.xpose.msra.mxu0 0.0
    %1482 = vmatpush.xpose.msra.mxu0 0.0
    %1483 = vmatpush.xpose.msra.mxu0 0.0
    %1484 = vmatpush.xpose.msra.mxu0 0.0
    %1485 = vmatpush.xpose.msra.mxu0 0.0
    %1486 = vmatpush.xpose.msra.mxu0 0.0
    %1487 = vmatpush.xpose.msra.mxu0 0.0
    %1488 = vmatpush.xpose.msra.mxu0 %v1471
    %1489 = vmatmul.f32.gmra.mxu0 %v1469
    %v1490 = vpop.f32.mrf.mxu0
    %v1491 = vadd.f32 %v30, %v1490
    %1492 = vdwg.mxu0
    %1493 = vrot.lane.b32.xlu0 %v947, 104
    %v1494 = vpop.permute.xlu0 %1493
    %1495 = vrot.lane.b32.xlu0 %v993, 104
    %v1496 = vpop.permute.xlu0 %1495
    %v1497 = vsel %vm152, %v1494, 0
    %v1499 = vsel %vm152, %v1496, 0
    %1501 = vmatpush.xpose.msra.mxu0 0.0
    %1502 = vmatpush.xpose.msra.mxu0 0.0
    %1503 = vmatpush.xpose.msra.mxu0 0.0
    %1504 = vmatpush.xpose.msra.mxu0 0.0
    %1505 = vmatpush.xpose.msra.mxu0 0.0
    %1506 = vmatpush.xpose.msra.mxu0 0.0
    %1507 = vmatpush.xpose.msra.mxu0 0.0
    %1508 = vmatpush.xpose.msra.mxu0 0.0
    %1509 = vmatpush.xpose.msra.mxu0 0.0
    %1510 = vmatpush.xpose.msra.mxu0 0.0
    %1511 = vmatpush.xpose.msra.mxu0 0.0
    %1512 = vmatpush.xpose.msra.mxu0 0.0
    %1513 = vmatpush.xpose.msra.mxu0 0.0
    %1514 = vmatpush.xpose.msra.mxu0 0.0
    %1515 = vmatpush.xpose.msra.mxu0 0.0
    %1516 = vmatpush.xpose.msra.mxu0 %v1499
    %1517 = vmatmul.f32.gmra.mxu0 %v1497
    %v1518 = vpop.f32.mrf.mxu0
    %v1519 = vadd.f32 %v30, %v1518
    %1520 = vdwg.mxu0
    %v1521 = vsel %vm152, %v1491, -inf
    %1522 = vmax.xlane.f32.xlu0 %v1521
    %v1523 = vpop.xlane.xlu0 %1522
    %v1524 = vsel %vm152, %v1519, -inf
    %1525 = vmax.xlane.f32.xlu0 %v1524
    %v1526 = vpop.xlane.xlu0 %1525
    %v1527 = vsub.f32 %v1491, %v1523
    %v1528 = vsub.f32 %v1519, %v1526
    %v1529 = vmul.f32 %v1527, 1.442695
    %v1530 = vpow.pop %v1529
    %v1531 = vmul.f32 %v1528, 1.442695
    %v1532 = vpow.pop %v1531
    %v1533 = vsel %vm152, %v1530, 0.0
    %1534 = vadd.xlane.f32.xlu0 %v1533
    %v1535 = vpop.xlane.xlu0 %1534
    %v1536 = vsel %vm152, %v1532, 0.0
    %1537 = vadd.xlane.f32.xlu0 %v1536
    %v1538 = vpop.xlane.xlu0 %1537
    %v1539 = vrcp.pop %v1535
    %v1540 = vmul.f32 %v1535, %v1539
    %v1541 = vsub.f32 1.0, %v1540
    %v1542 = vmul.f32 %v1539, %v1541
    %v1543 = vadd.f32 %v1539, %v1542
    %vm1544 = vweird.f32 %v1535
    %vm1545 = vweird.f32 %v1539
    %vm1546 = vmor %vm1544, %vm1545
    %v1547 = vsel %vm1546, %v1539, %v1543
    %v1548 = vand.u32 2147483647, %v1535
    %vm1549 = vcmp.eq.f32.partialorder %v1548, 8.507059e+37
    %v1550 = vand.u32 %v1535, 2147483648
    %v1551 = vor.u32 1.1754944e-38, %v1550
    %v1552 = vsel %vm1549, %v1551, %v1547
    %v1553 = vrcp.pop %v1538
    %v1554 = vmul.f32 %v1538, %v1553
    %v1555 = vsub.f32 1.0, %v1554
    %v1556 = vmul.f32 %v1553, %v1555
    %v1557 = vadd.f32 %v1553, %v1556
    %vm1558 = vweird.f32 %v1538
    %vm1559 = vweird.f32 %v1553
    %vm1560 = vmor %vm1558, %vm1559
    %v1561 = vsel %vm1560, %v1553, %v1557
    %v1562 = vand.u32 2147483647, %v1538
    %vm1563 = vcmp.eq.f32.partialorder %v1562, 8.507059e+37
    %v1564 = vand.u32 %v1538, 2147483648
    %v1565 = vor.u32 1.1754944e-38, %v1564
    %v1566 = vsel %vm1563, %v1565, %v1561
    %v1567 = vmul.f32 %v1530, %v1552
    %v1568 = vmul.f32 %v1532, %v1566
    %1569 = vrot.lane.b32.xlu0 %v996, 72
    %v1570 = vpop.permute.xlu0 %1569
    %v1573 = vsel %vm152, %v1567, 0
    %1575 = vmatpush.msra.mxu0 0.0
    %1576 = vmatpush.msra.mxu0 0.0
    %1577 = vmatpush.msra.mxu0 0.0
    %1578 = vmatpush.msra.mxu0 0.0
    %1579 = vmatpush.msra.mxu0 0.0
    %1580 = vmatpush.msra.mxu0 0.0
    %1581 = vmatpush.msra.mxu0 0.0
    %1582 = vmatpush.msra.mxu0 0.0
    %1583 = vmatpush.msra.mxu0 0.0
    %1584 = vmatpush.msra.mxu0 0.0
    %1585 = vmatpush.msra.mxu0 0.0
    %1586 = vmatpush.msra.mxu0 0.0
    %1587 = vmatpush.msra.mxu0 0.0
    %1588 = vmatpush.msra.mxu0 0.0
    %1589 = vmatpush.msra.mxu0 0.0
    %1590 = vmatpush.msra.mxu0 %v1570
    %1591 = vmatmul.f32.gmra.mxu0 %v1573
    %v1592 = vpop.f32.mrf.mxu0
    %v1593 = vadd.f32 0.0, %v1592
    %1594 = vdwg.mxu0
    %1595 = vrot.lane.b32.xlu0 %v997, 72
    %v1596 = vpop.permute.xlu0 %1595
    %v1599 = vsel %vm152, %v1568, 0
    %1601 = vmatpush.msra.mxu0 0.0
    %1602 = vmatpush.msra.mxu0 0.0
    %1603 = vmatpush.msra.mxu0 0.0
    %1604 = vmatpush.msra.mxu0 0.0
    %1605 = vmatpush.msra.mxu0 0.0
    %1606 = vmatpush.msra.mxu0 0.0
    %1607 = vmatpush.msra.mxu0 0.0
    %1608 = vmatpush.msra.mxu0 0.0
    %1609 = vmatpush.msra.mxu0 0.0
    %1610 = vmatpush.msra.mxu0 0.0
    %1611 = vmatpush.msra.mxu0 0.0
    %1612 = vmatpush.msra.mxu0 0.0
    %1613 = vmatpush.msra.mxu0 0.0
    %1614 = vmatpush.msra.mxu0 0.0
    %1615 = vmatpush.msra.mxu0 0.0
    %1616 = vmatpush.msra.mxu0 %v1596
    %1617 = vmatmul.f32.gmra.mxu0 %v1599
    %v1618 = vpop.f32.mrf.mxu0
    %v1619 = vadd.f32 0.0, %v1618
    %1620 = vdwg.mxu0
    %1623 = vrot.lane.b32.xlu0 %v1281, 8
    %v1624 = vpop.permute.xlu0 %1623
    %1625 = vrot.lane.b32.xlu0 %v1307, 8
    %v1626 = vpop.permute.xlu0 %1625
    %1631 = vrot.lane.b32.xlu0 %v1437, 16
    %v1632 = vpop.permute.xlu0 %1631
    %1633 = vrot.lane.b32.xlu0 %v1463, 16
    %v1634 = vpop.permute.xlu0 %1633
    %1639 = vrot.lane.b32.xlu0 %v1593, 24
    %v1640 = vpop.permute.xlu0 %1639
    %1641 = vrot.lane.b32.xlu0 %v1619, 24
    %v1642 = vpop.permute.xlu0 %1641
    %v1645 = vsel %vm152, %v1124, %v1624
    %v1646 = vsel %vm152, %v1151, %v1626
    %v1647 = vsel %vm800, %v1645, %v1632
    %v1648 = vsel %vm800, %v1646, %v1634
    %v1649 = vsel %vm803, %v1647, %v1640
    %v1650 = vsel %vm803, %v1648, %v1642
    %v1651 = vperm.slane %v998, 0
    %1656 = vrot.lane.b32.xlu0 %v916, 96
    %v1657 = vpop.permute.xlu0 %1656
    %1658 = vrot.lane.b32.xlu0 %v917, 96
    %v1659 = vpop.permute.xlu0 %1658
    %1660 = vrot.lane.b32.xlu0 %v918, 96
    %v1661 = vpop.permute.xlu0 %1660
    %1662 = vrot.lane.b32.xlu0 %v919, 96
    %v1663 = vpop.permute.xlu0 %1662
    %1669 = vrot.lane.b32.xlu0 %v1651, 96
    %v1670 = vpop.permute.xlu0 %1669
    %v1673 = vsel %vm31, %v1649, 0
    %v1676 = vsel %vm31, %v1650, 0
    %1678 = vmatpush.msra.mxu0 0.0
    %1679 = vmatpush.msra.mxu0 0.0
    %1680 = vmatpush.msra.mxu0 0.0
    %1681 = vmatpush.msra.mxu0 0.0
    %1682 = vmatpush.msra.mxu0 0.0
    %1683 = vmatpush.msra.mxu0 0.0
    %1684 = vmatpush.msra.mxu0 0.0
    %1685 = vmatpush.msra.mxu0 0.0
    %1686 = vmatpush.msra.mxu0 0.0
    %1687 = vmatpush.msra.mxu0 0.0
    %1688 = vmatpush.msra.mxu0 0.0
    %1689 = vmatpush.msra.mxu0 0.0
    %1690 = vmatpush.msra.mxu0 %v1663
    %1691 = vmatpush.msra.mxu0 %v1661
    %1692 = vmatpush.msra.mxu0 %v1659
    %1693 = vmatpush.msra.mxu0 %v1657
    %1694 = vmatmul.f32.gmra.mxu0 %v1673
    %v1695 = vpop.f32.mrf.mxu0
    %v1696 = vadd.f32 %v1670, %v1695
    %1697 = vmatmul.f32.gmra.mxu0 %v1676
    %v1698 = vpop.f32.mrf.mxu0
    %v1699 = vadd.f32 %v1670, %v1698
    %1700 = vdwg.mxu0
    %v1701 = vadd.f32 %v856, %v1696
    %v1702 = vadd.f32 %v857, %v1699
    %v1703 = vsel %vm31, %v1701, 0.0
    %1704 = vadd.xlane.f32.xlu0 %v1703
    %v1705 = vpop.xlane.xlu0 %1704
    %v1706 = vsel %vm31, %v1702, 0.0
    %1707 = vadd.xlane.f32.xlu0 %v1706
    %v1708 = vpop.xlane.xlu0 %1707
    %v1709 = vmul.f32 %v1705, %v44
    %v1710 = vmul.f32 %v1708, %v44
    %v1711 = vsub.f32 %v1701, %v1709
    %v1712 = vsub.f32 %v1702, %v1710
    %v1713 = vmul.f32 %v1711, %v1711
    %v1714 = vmul.f32 %v1712, %v1712
    %v1715 = vsel %vm31, %v1713, 0.0
    %1716 = vadd.xlane.f32.xlu0 %v1715
    %v1717 = vpop.xlane.xlu0 %1716
    %v1718 = vsel %vm31, %v1714, 0.0
    %1719 = vadd.xlane.f32.xlu0 %v1718
    %v1720 = vpop.xlane.xlu0 %1719
    %v1721 = vmul.f32 %v1717, %v44
    %v1722 = vmul.f32 %v1720, %v44
    %v1723 = vadd.f32 %v1721, 1e-05
    %v1724 = vadd.f32 %v1722, 1e-05
    %v1725 = vrsqrt.pop %v1723
    %v1726 = vmul.f32 %v1725, %v1723
    %v1727 = vmul.f32 %v1726, %v1725
    %v1728 = vmul.f32 0.5, %v1727
    %v1729 = vsub.f32 1.5, %v1728
    %v1730 = vmul.f32 %v1725, %v1729
    %vm1731 = vweird.f32 %v1723
    %vm1732 = vweird.f32 %v1725
    %vm1733 = vmor %vm1731, %vm1732
    %v1734 = vsel %vm1733, %v1725, %v1730
    %v1735 = vrsqrt.pop %v1724
    %v1736 = vmul.f32 %v1735, %v1724
    %v1737 = vmul.f32 %v1736, %v1735
    %v1738 = vmul.f32 0.5, %v1737
    %v1739 = vsub.f32 1.5, %v1738
    %v1740 = vmul.f32 %v1735, %v1739
    %vm1741 = vweird.f32 %v1724
    %vm1742 = vweird.f32 %v1735
    %vm1743 = vmor %vm1741, %vm1742
    %v1744 = vsel %vm1743, %v1735, %v1740
    %v1745 = vmul.f32 %v1711, %v1734
    %v1746 = vmul.f32 %v1712, %v1744
    %v1747 = vperm.slane %v23, 0
    %1749 = vrot.lane.b32.xlu0 %v1747, 96
    %v1750 = vpop.permute.xlu0 %1749
    %v1752 = vmul.f32 %v1745, %v1750
    %v1753 = vmul.f32 %v1746, %v1750
    %v1754 = vperm.slane %v24, 0
    %1756 = vrot.lane.b32.xlu0 %v1754, 96
    %v1757 = vpop.permute.xlu0 %1756
    %v1759 = vadd.f32 %v1752, %v1757
    %v1760 = vadd.f32 %v1753, %v1757
    %v1761 = vld [vmem:[%s1 + $0x8] sm:$0xff]
    %v1762 = vld [vmem:[%s1 + $0x20] sm:$0xff]
    %v1763 = vld [vmem:[%s1 + $0x38] sm:$0xff]
    %v1764 = vld [vmem:[%s1 + $0x50] sm:$0xff]
    %v1765 = vld [vmem:[%s2] sm:$0x1]
    %v1766 = vperm.slane %v1765, 0
    %1771 = vrot.lane.b32.xlu0 %v1761, 64
    %v1772 = vpop.permute.xlu0 %1771
    %1773 = vrot.lane.b32.xlu0 %v1762, 64
    %v1774 = vpop.permute.xlu0 %1773
    %1775 = vrot.lane.b32.xlu0 %v1763, 64
    %v1776 = vpop.permute.xlu0 %1775
    %1777 = vrot.lane.b32.xlu0 %v1764, 64
    %v1778 = vpop.permute.xlu0 %1777
    %1784 = vrot.lane.b32.xlu0 %v1766, 64
    %v1785 = vpop.permute.xlu0 %1784
    %v1788 = vsel %vm31, %v1759, 0
    %v1791 = vsel %vm31, %v1760, 0
    %1793 = vmatpush.msra.mxu0 0.0
    %1794 = vmatpush.msra.mxu0 0.0
    %1795 = vmatpush.msra.mxu0 0.0
    %1796 = vmatpush.msra.mxu0 0.0
    %1797 = vmatpush.msra.mxu0 0.0
    %1798 = vmatpush.msra.mxu0 0.0
    %1799 = vmatpush.msra.mxu0 0.0
    %1800 = vmatpush.msra.mxu0 0.0
    %1801 = vmatpush.msra.mxu0 0.0
    %1802 = vmatpush.msra.mxu0 0.0
    %1803 = vmatpush.msra.mxu0 0.0
    %1804 = vmatpush.msra.mxu0 0.0
    %1805 = vmatpush.msra.mxu0 %v1778
    %1806 = vmatpush.msra.mxu0 %v1776
    %1807 = vmatpush.msra.mxu0 %v1774
    %1808 = vmatpush.msra.mxu0 %v1772
    %1809 = vmatmul.f32.gmra.mxu0 %v1788
    %v1810 = vpop.f32.mrf.mxu0
    %v1811 = vadd.f32 %v1785, %v1810
    %1812 = vmatmul.f32.gmra.mxu0 %v1791
    %v1813 = vpop.f32.mrf.mxu0
    %v1814 = vadd.f32 %v1785, %v1813
    %1815 = vdwg.mxu0
    %v1816 = vmax.f32 %v1811, 0.0
    %v1817 = vmax.f32 %v1814, 0.0
    %v1818 = vld [vmem:[%s2] sm:$0xff]
    %v1819 = vld [vmem:[%s2 + $0x8] sm:$0xff]
    %v1820 = vld [vmem:[%s2 + $0x10] sm:$0xff]
    %v1821 = vld [vmem:[%s2 + $0x18] sm:$0xff]
    %v1822 = vld [vmem:[%s2 + $0x20] sm:$0xff]
    %v1823 = vld [vmem:[%s2 + $0x28] sm:$0xff]
    %v1824 = vld [vmem:[%s2 + $0x30] sm:$0xff]
    %v1825 = vld [vmem:[%s2 + $0x38] sm:$0xff]
    %v1826 = vld [vmem:[%s2 + $0x4] sm:$0x1]
    %v1827 = vperm.slane %v1826, 0
    %1829 = vrot.lane.b32.xlu0 %v1827, 96
    %v1830 = vpop.permute.xlu0 %1829
    %vm1832 = vcmask 523264
    %v1834 = vsel %vm1832, %v1816, 0
    %v1837 = vsel %vm1832, %v1817, 0
    %1839 = vmatpush.msra.mxu0 0.0
    %1840 = vmatpush.msra.mxu0 0.0
    %1841 = vmatpush.msra.mxu0 0.0
    %1842 = vmatpush.msra.mxu0 0.0
    %1843 = vmatpush.msra.mxu0 0.0
    %1844 = vmatpush.msra.mxu0 0.0
    %1845 = vmatpush.msra.mxu0 0.0
    %1846 = vmatpush.msra.mxu0 0.0
    %1847 = vmatpush.msra.mxu0 %v1825
    %1848 = vmatpush.msra.mxu0 %v1824
    %1849 = vmatpush.msra.mxu0 %v1823
    %1850 = vmatpush.msra.mxu0 %v1822
    %1851 = vmatpush.msra.mxu0 %v1821
    %1852 = vmatpush.msra.mxu0 %v1820
    %1853 = vmatpush.msra.mxu0 %v1819
    %1854 = vmatpush.msra.mxu0 %v1818
    %1855 = vmatmul.f32.gmra.mxu0 %v1834
    %v1856 = vpop.f32.mrf.mxu0
    %v1857 = vadd.f32 %v1830, %v1856
    %1858 = vmatmul.f32.gmra.mxu0 %v1837
    %v1859 = vpop.f32.mrf.mxu0
    %v1860 = vadd.f32 %v1830, %v1859
    %1861 = vdwg.mxu0
    %v1862 = vadd.f32 %v1701, %v1857
    %v1863 = vadd.f32 %v1702, %v1860
    %1864 = vst.msk [vmem:[#allocation2] sm:$0xff] %vm31, %v1862
    %1865 = vst.msk [vmem:[#allocation2 + $0x8] sm:$0xff] %vm31, %v1863
    // Predicated region
    $region14: #{act_decoder_layer.1} parent=1 // pred_check
      _
    $region15: #{act_decoder_layer.1} parent=1 // pred_check_branch
      %1867 = sbr.rel (0) target = $region17
    $region16: #{act_decoder_layer.1} parent=1 // pred_region
      %1869 = vsyncadd [#allocation3], 0
      %s1870 = sshll.u32 [#allocation2], 4
      %s1871 = int_to_ptr.vmem [resolvable:$true] %s1870
      %s1872 = sshll.u32 %s3, 4
      %s1873 = int_to_ptr.hbm [resolvable:$true] %s1872
      %1878 = dma.vmem_to_hbm [thread:$0]  %s1871, 256, %s1873, [#allocation3], 128, 128, 8
    $region17: #{act_decoder_layer.1} parent=1 // pred_fallthru
      _
    // Predicated region
    $region18: #{act_decoder_layer.1} parent=1 // pred_check
      _
    $region19: #{act_decoder_layer.1} parent=1 // pred_check_branch
      %1880 = sbr.rel (0) target = $region21
    $region20: #{act_decoder_layer.1} parent=1 // pred_region
      %1882 = dma.done [#allocation3], 256
    $region21: #{act_decoder_layer.1} parent=1 // pred_fallthru
      _
    %1883 = vsyncpa [#allocation3], 1

</llo_original>
